<compile_context>
chip_gen: v7x
topology: tpu7x:2x2x1
jax: 0.10.0
libtpu: 0.0.40
codegen_flags: <defaults>
</compile_context>

<pallas_src>
import functools

import numpy as np
import jax
import jax.numpy as jnp
from jax.experimental import pallas as pl
from jax.experimental.pallas import tpu as pltpu

NEG_SLOPE = 0.01   # nn.LeakyReLU default
BN_EPS = 1e-5      # nn.BatchNorm2d default


def _leaky_relu(x):
    return jnp.where(x > 0, x, NEG_SLOPE * x)


# ----------------------------------------------------------------------------
# Weight packing: fold KW taps, the Cin contraction, the W-axis zero padding
# AND the row pairing (2 image rows per packed row) into packed vertical-tap
# matrices.  Returns (G, kp_min) with G of shape (KP, 2*W*Cin, 2*W*Cout) s.t.
#     out_packed[r] = sum_t  in_packed[r + kp_min + t] @ G[t]
# where packed row r = concat(row[2r], row[2r+1]) with channels fastest, and
# out-of-range packed rows are zero.
# ----------------------------------------------------------------------------
def _pack_conv_weight_rowpair(w_oihw, W, npad, dilation):
    wk = jnp.transpose(w_oihw, (2, 3, 1, 0))              # (KH, KW, Cin, Cout)
    KH, KW, Cin, Cout = wk.shape

    # Per-kh width Toeplitz (W*Cin, W*Cout): KW taps + W zero-padding folded in.
    t_mats = []
    for kh in range(KH):
        m = jnp.zeros((W * Cin, W * Cout), wk.dtype)
        for kw in range(KW):
            off = kw * dilation - npad                    # w_in = w_out + off
            sel = np.eye(W, dtype=np.float32, k=-off)     # sel[w_in, w_out] = 1
            m = m + jnp.kron(jnp.asarray(sel), wk[kh, kw])
        t_mats.append(m)

    # Fold the row pairing: vertical offset d = j + kh*dil - npad splits as
    # d = 2*kp + i (i in {0,1}); block (i_in, j_out) of packed tap kp
    # accumulates the kh width-Toeplitz.
    ds = [j + kh * dilation - npad for j in (0, 1) for kh in range(KH)]
    kp_min = min(d // 2 for d in ds)
    kp_max = max(d // 2 for d in ds)
    mats = []
    for kp in range(kp_min, kp_max + 1):
        g = jnp.zeros((2 * W * Cin, 2 * W * Cout), wk.dtype)
        for j in (0, 1):
            for kh in range(KH):
                d = j + kh * dilation - npad
                if d // 2 != kp:
                    continue
                i = d - 2 * kp
                e = np.zeros((2, 2), np.float32)
                e[i, j] = 1.0
                g = g + jnp.kron(jnp.asarray(e), t_mats[kh])
        mats.append(g)
    return jnp.stack(mats), kp_min                        # (KP, 2WC, 2WC)


# ----------------------------------------------------------------------------
# Single fused kernel: conv1 -> BatchNorm(batch stats) -> LeakyReLU -> conv2
# -> +bias -> +x -> LeakyReLU.  Whole batch resident in VMEM; no grid.
# ----------------------------------------------------------------------------
def _resnet_block_kernel(x_ref, g1_ref, g2_ref, b2_ref, gamma_ref, beta_ref,
                         o_ref, pad_ref, *, kp_min, channels, count):
    N, H2, L = x_ref.shape
    KP = g1_ref.shape[0]
    M = N * H2
    pad_top = -kp_min

    # Zero the padded scratch once (single invocation); the halo rows stay
    # zero for both convs, the interior is overwritten before every use.
    pad_ref[...] = jnp.zeros_like(pad_ref)

    def conv(act, g_ref):
        # act: (M, L) packed activation -> (M, L) f32 conv output.
        # One (M, L) x (L, L) MXU matmul per packed vertical tap; the first
        # tap initializes the accumulator (no zeros + add).
        pad_ref[:, pad_top:pad_top + H2, :] = act.reshape(N, H2, L)
        acc = None
        for t in range(KP):                               # static unroll
            s = pad_top + kp_min + t
            xs = pad_ref[:, s:s + H2, :].reshape(M, L)
            p = jnp.dot(xs, g_ref[t], preferred_element_type=jnp.float32)
            acc = p if acc is None else acc + p
        return acc

    x = x_ref[...].astype(jnp.float32).reshape(M, L)

    # conv1 (bias omitted: a per-channel bias cancels exactly under
    # train-mode BatchNorm's mean subtraction).
    h = conv(x, g1_ref)

    # BatchNorm2d, train-mode batch statistics, centered variance.
    # Per-channel reductions across lanes are done with a channel projection
    # matmul (proj[l, m] = 1 iff l%C == m%C) so everything stays in the
    # lane-dense layout and the otherwise-idle MXU does the cross-lane work.
    row = jax.lax.broadcasted_iota(jnp.int32, (L, L), 0) % channels
    col = jax.lax.broadcasted_iota(jnp.int32, (L, L), 1) % channels
    proj = (row == col).astype(jnp.float32)
    inv_count = 1.0 / count
    mean = jnp.dot(jnp.sum(h, axis=0, keepdims=True), proj,
                   preferred_element_type=jnp.float32) * inv_count
    diff = h - mean
    var = jnp.dot(jnp.sum(diff * diff, axis=0, keepdims=True), proj,
                  preferred_element_type=jnp.float32) * inv_count
    scale = gamma_ref[...] * jax.lax.rsqrt(var + BN_EPS)
    shift = beta_ref[...] - mean * scale
    hn = _leaky_relu(h * scale + shift)

    # conv2 + bias + residual + LeakyReLU.
    res = conv(hn, g2_ref) + b2_ref[...]
    out = _leaky_relu(x + res)
    o_ref[...] = out.reshape(N, H2, L).astype(o_ref.dtype)


# ----------------------------------------------------------------------------
# Wrapper: layout packing, row-pair Toeplitz weight build, one pallas_call.
# ----------------------------------------------------------------------------
def resnet_block_forward(x_nchw, params, kernel_size, dilation=1):
    npad = (kernel_size + (kernel_size - 1) * (dilation - 1) - 1) // 2
    assert (kernel_size - 1) * dilation == 2 * npad, \
        "residual add requires a same-size conv output"

    N, C, H, W = x_nchw.shape
    assert H % 2 == 0, "row-pair lane packing needs an even height"
    H2 = H // 2
    L = 2 * W * C                      # packed lane width (= 128 for the demo)

    # NCHW -> lane-dense row-pair packed (N, H/2, 2*W*C), channels fastest.
    # TODO(synk): if the caller can supply/consume NHWC (or this packed
    # layout) the two XLA transposes bracketing the kernel could be removed.
    x = jnp.transpose(x_nchw, (0, 2, 3, 1)).reshape(N, H2, L)

    g1, kp_min = _pack_conv_weight_rowpair(params["w1"], W, npad, dilation)
    g2, _ = _pack_conv_weight_rowpair(params["w2"], W, npad, dilation)
    KP = g1.shape[0]
    assert -kp_min < H2 and (kp_min + KP - 1) < H2

    b2 = jnp.tile(params["b2"], 2 * W).reshape(1, L)
    gamma = jnp.tile(params["gamma"], 2 * W).reshape(1, L)
    beta = jnp.tile(params["beta"], 2 * W).reshape(1, L)

    kernel = functools.partial(_resnet_block_kernel, kp_min=kp_min,
                               channels=C, count=N * H * W)

    vmem = pl.BlockSpec(memory_space=pltpu.MemorySpace.VMEM)
    out = pl.pallas_call(
        kernel,
        out_shape=jax.ShapeDtypeStruct((N, H2, L), x_nchw.dtype),
        in_specs=[vmem, vmem, vmem, vmem, vmem, vmem],
        out_specs=vmem,
        scratch_shapes=[pltpu.VMEM((N, H2 + KP - 1, L), jnp.float32)],
        compiler_params=pltpu.CompilerParams(
            vmem_limit_bytes=32 * 1024 * 1024),
    )(x, g1, g2, b2, gamma, beta)

    # packed (N, H/2, 2*W*C) -> NCHW
    return jnp.transpose(out.reshape(N, H2, 2, W, C),
                         (0, 4, 1, 2, 3)).reshape(N, C, H, W)


# ----------------------------------------------------------------------------
# Pure-JAX reference (same math, via lax.conv) used only for a sanity check.
# ----------------------------------------------------------------------------
def reference_forward(x, params, kernel_size, dilation=1):
    npad = (kernel_size + (kernel_size - 1) * (dilation - 1) - 1) // 2
    dn = ("NCHW", "OIHW", "NCHW")

    def conv(inp, w, b):
        y = jax.lax.conv_general_dilated(
            inp, w, window_strides=(1, 1),
            padding=[(npad, npad), (npad, npad)],
            rhs_dilation=(dilation, dilation), dimension_numbers=dn)
        return y + b[None, :, None, None]

    y = conv(x, params["w1"], params["b1"])
    mean = y.mean(axis=(0, 2, 3), keepdims=True)
    var = ((y - mean) ** 2).mean(axis=(0, 2, 3), keepdims=True)
    y = (y - mean) / jnp.sqrt(var + BN_EPS)
    y = y * params["gamma"][None, :, None, None] + params["beta"][None, :, None, None]
    y = jnp.where(y > 0, y, NEG_SLOPE * y)
    r = conv(y, params["w2"], params["b2"])
    s = x + r
    return jnp.where(s > 0, s, NEG_SLOPE * s)


def init_params(key, n_channels, kernel_size):
    # Deterministic init mimicking PyTorch Conv2d defaults: U(-1/sqrt(fan_in), ...)
    fan_in = n_channels * kernel_size * kernel_size
    bound = 1.0 / jnp.sqrt(fan_in)
    k1, k2, k3, k4 = jax.random.split(key, 4)
    shape_w = (n_channels, n_channels, kernel_size, kernel_size)  # (Cout,Cin,KH,KW)
    return {
        "w1": jax.random.uniform(k1, shape_w, jnp.float32, -bound, bound),
        "b1": jax.random.uniform(k2, (n_channels,), jnp.float32, -bound, bound),
        "gamma": jnp.ones((n_channels,), jnp.float32),   # BatchNorm2d weight
        "beta": jnp.zeros((n_channels,), jnp.float32),   # BatchNorm2d bias
        "w2": jax.random.uniform(k3, shape_w, jnp.float32, -bound, bound),
        "b2": jax.random.uniform(k4, (n_channels,), jnp.float32, -bound, bound),
    }


if __name__ == "__main__":
    n_channels, kernel_size, dilation = 4, 3, 1
    N, H, W = 2, 16, 16

    key = jax.random.PRNGKey(0)
    k_x, k_p = jax.random.split(key)
    x = jax.random.normal(k_x, (N, n_channels, H, W), jnp.float32)  # NCHW, like torch
    params = init_params(k_p, n_channels, kernel_size)

    fwd = jax.jit(functools.partial(resnet_block_forward,
                                    kernel_size=kernel_size, dilation=dilation))
    out = jax.block_until_ready(fwd(x, params))

    ref = jax.block_until_ready(reference_forward(x, params, kernel_size, dilation))
    assert out.shape == x.shape and out.dtype == x.dtype
    err = float(jnp.max(jnp.abs(out - ref)))
    assert err < 2e-4, f"max abs err {err}"

    print("KERNEL_OK")
</pallas_src>

<mosaic_0001>
module attributes {stable_mosaic.version = 11 : i64} {
  func.func @_resnet_block_kernel(%arg0: memref<2x8x128xf32, #tpu.memory_space<vmem>>, %arg1: memref<3x128x128xf32, #tpu.memory_space<vmem>>, %arg2: memref<3x128x128xf32, #tpu.memory_space<vmem>>, %arg3: memref<1x128xf32, #tpu.memory_space<vmem>>, %arg4: memref<1x128xf32, #tpu.memory_space<vmem>>, %arg5: memref<1x128xf32, #tpu.memory_space<vmem>>, %arg6: memref<2x8x128xf32, #tpu.memory_space<vmem>>, %arg7: memref<2x10x128xf32, #tpu.memory_space<vmem>>) attributes {dimension_semantics = [], scalar_prefetch = 0 : i64, scratch_operands = 1 : i64, tpu.core_type = #tpu.core_type<tc>} {
    %cst = arith.constant 0.000000e+00 : f32
    %0 = vector.broadcast %cst : f32 to vector<2x10x128xf32>
    %c0 = arith.constant 0 : index
    %c0_0 = arith.constant 0 : index
    %c0_1 = arith.constant 0 : index
    %1 = vector.load %arg7[%c0, %c0_0, %c0_1] : memref<2x10x128xf32, #tpu.memory_space<vmem>>, vector<2x10x128xf32>
    tpu.vector_store %arg7[%c0, %c0_0, %c0_1], %0 {strides = array<i32>} : memref<2x10x128xf32, #tpu.memory_space<vmem>>, vector<2x10x128xf32>,
    %c0_2 = arith.constant 0 : index
    %c0_3 = arith.constant 0 : index
    %c0_4 = arith.constant 0 : index
    %2 = vector.load %arg0[%c0_2, %c0_3, %c0_4] : memref<2x8x128xf32, #tpu.memory_space<vmem>>, vector<2x8x128xf32>
    %3 = vector.shape_cast %2 : vector<2x8x128xf32> to vector<16x128xf32>
    %4 = vector.shape_cast %3 : vector<16x128xf32> to vector<2x8x128xf32>
    %c0_5 = arith.constant 0 : index
    %c1 = arith.constant 1 : index
    %c0_6 = arith.constant 0 : index
    %5 = vector.load %arg7[%c0_5, %c1, %c0_6] : memref<2x10x128xf32, #tpu.memory_space<vmem>>, vector<2x8x128xf32>
    tpu.vector_store %arg7[%c0_5, %c1, %c0_6], %4 {strides = array<i32>} : memref<2x10x128xf32, #tpu.memory_space<vmem>>, vector<2x8x128xf32>,
    %c0_7 = arith.constant 0 : index
    %c0_8 = arith.constant 0 : index
    %c0_9 = arith.constant 0 : index
    %6 = vector.load %arg7[%c0_7, %c0_8, %c0_9] : memref<2x10x128xf32, #tpu.memory_space<vmem>>, vector<2x8x128xf32>
    %7 = vector.shape_cast %6 : vector<2x8x128xf32> to vector<16x128xf32>
    %c0_10 = arith.constant 0 : index
    %c0_11 = arith.constant 0 : index
    %c0_12 = arith.constant 0 : index
    %8 = vector.load %arg1[%c0_10, %c0_11, %c0_12] : memref<3x128x128xf32, #tpu.memory_space<vmem>>, vector<1x128x128xf32>
    %9 = vector.shape_cast %8 : vector<1x128x128xf32> to vector<128x128xf32>
    %cst_13 = arith.constant dense<0.000000e+00> : vector<16x128xf32>
    %10 = tpu.matmul %7, %9, %cst_13 {dimension_numbers = #tpu.dot_dimension_numbers<[1], [0], [0], [1], [0, 0, 1, 1], [], []>} : vector<16x128xf32>, vector<128x128xf32>, vector<16x128xf32> -> vector<16x128xf32>
    %c0_14 = arith.constant 0 : index
    %c1_15 = arith.constant 1 : index
    %c0_16 = arith.constant 0 : index
    %11 = vector.load %arg7[%c0_14, %c1_15, %c0_16] : memref<2x10x128xf32, #tpu.memory_space<vmem>>, vector<2x8x128xf32>
    %12 = vector.shape_cast %11 : vector<2x8x128xf32> to vector<16x128xf32>
    %c1_17 = arith.constant 1 : index
    %c0_18 = arith.constant 0 : index
    %c0_19 = arith.constant 0 : index
    %13 = vector.load %arg1[%c1_17, %c0_18, %c0_19] : memref<3x128x128xf32, #tpu.memory_space<vmem>>, vector<1x128x128xf32>
    %14 = vector.shape_cast %13 : vector<1x128x128xf32> to vector<128x128xf32>
    %cst_20 = arith.constant dense<0.000000e+00> : vector<16x128xf32>
    %15 = tpu.matmul %12, %14, %cst_20 {dimension_numbers = #tpu.dot_dimension_numbers<[1], [0], [0], [1], [0, 0, 1, 1], [], []>} : vector<16x128xf32>, vector<128x128xf32>, vector<16x128xf32> -> vector<16x128xf32>
    %16 = arith.addf %10, %15 : vector<16x128xf32>
    %c0_21 = arith.constant 0 : index
    %c2 = arith.constant 2 : index
    %c0_22 = arith.constant 0 : index
    %17 = vector.load %arg7[%c0_21, %c2, %c0_22] : memref<2x10x128xf32, #tpu.memory_space<vmem>>, vector<2x8x128xf32>
    %18 = vector.shape_cast %17 : vector<2x8x128xf32> to vector<16x128xf32>
    %c2_23 = arith.constant 2 : index
    %c0_24 = arith.constant 0 : index
    %c0_25 = arith.constant 0 : index
    %19 = vector.load %arg1[%c2_23, %c0_24, %c0_25] : memref<3x128x128xf32, #tpu.memory_space<vmem>>, vector<1x128x128xf32>
    %20 = vector.shape_cast %19 : vector<1x128x128xf32> to vector<128x128xf32>
    %cst_26 = arith.constant dense<0.000000e+00> : vector<16x128xf32>
    %21 = tpu.matmul %18, %20, %cst_26 {dimension_numbers = #tpu.dot_dimension_numbers<[1], [0], [0], [1], [0, 0, 1, 1], [], []>} : vector<16x128xf32>, vector<128x128xf32>, vector<16x128xf32> -> vector<16x128xf32>
    %22 = arith.addf %16, %21 : vector<16x128xf32>
    %23 = tpu.iota {dimensions = array<i32: 0>} : vector<128x128xi32>
    %c4_i32 = arith.constant 4 : i32
    %c0_i32 = arith.constant 0 : i32
    %24 = arith.cmpi eq, %c4_i32, %c0_i32 : i32
    %c1_i32 = arith.constant 1 : i32
    %25 = arith.select %24, %c1_i32, %c4_i32 : i32
    %26 = vector.broadcast %25 : i32 to vector<128x128xi32>
    %27 = arith.remsi %23, %26 : vector<128x128xi32>
    %c0_i32_27 = arith.constant 0 : i32
    %28 = vector.broadcast %c0_i32_27 : i32 to vector<128x128xi32>
    %29 = arith.cmpi ne, %27, %28 : vector<128x128xi32>
    %c0_i32_28 = arith.constant 0 : i32
    %30 = vector.broadcast %c0_i32_28 : i32 to vector<128x128xi32>
    %31 = arith.cmpi slt, %27, %30 : vector<128x128xi32>
    %c0_i32_29 = arith.constant 0 : i32
    %32 = arith.cmpi slt, %25, %c0_i32_29 : i32
    %33 = vector.broadcast %32 : i1 to vector<128x128xi1>
    %34 = vector.broadcast %33 : vector<128x128xi1> to vector<128x128xi1>
    %35 = arith.xori %31, %34 : vector<128x128xi1>
    %36 = arith.andi %35, %29 : vector<128x128xi1>
    %37 = vector.broadcast %25 : i32 to vector<128x128xi32>
    %38 = arith.addi %27, %37 : vector<128x128xi32>
    %39 = arith.select %36, %38, %27 : vector<128x128xi1>, vector<128x128xi32>
    %40 = tpu.iota {dimensions = array<i32: 1>} : vector<128x128xi32>
    %c4_i32_30 = arith.constant 4 : i32
    %c0_i32_31 = arith.constant 0 : i32
    %41 = arith.cmpi eq, %c4_i32_30, %c0_i32_31 : i32
    %c1_i32_32 = arith.constant 1 : i32
    %42 = arith.select %41, %c1_i32_32, %c4_i32_30 : i32
    %43 = vector.broadcast %42 : i32 to vector<128x128xi32>
    %44 = arith.remsi %40, %43 : vector<128x128xi32>
    %c0_i32_33 = arith.constant 0 : i32
    %45 = vector.broadcast %c0_i32_33 : i32 to vector<128x128xi32>
    %46 = arith.cmpi ne, %44, %45 : vector<128x128xi32>
    %c0_i32_34 = arith.constant 0 : i32
    %47 = vector.broadcast %c0_i32_34 : i32 to vector<128x128xi32>
    %48 = arith.cmpi slt, %44, %47 : vector<128x128xi32>
    %c0_i32_35 = arith.constant 0 : i32
    %49 = arith.cmpi slt, %42, %c0_i32_35 : i32
    %50 = vector.broadcast %49 : i1 to vector<128x128xi1>
    %51 = vector.broadcast %50 : vector<128x128xi1> to vector<128x128xi1>
    %52 = arith.xori %48, %51 : vector<128x128xi1>
    %53 = arith.andi %52, %46 : vector<128x128xi1>
    %54 = vector.broadcast %42 : i32 to vector<128x128xi32>
    %55 = arith.addi %44, %54 : vector<128x128xi32>
    %56 = arith.select %53, %55, %44 : vector<128x128xi1>, vector<128x128xi32>
    %57 = arith.cmpi eq, %39, %56 : vector<128x128xi32>
    %58 = arith.extui %57 : vector<128x128xi1> to vector<128x128xi32>
    %59 = arith.sitofp %58 : vector<128x128xi32> to vector<128x128xf32>
    %cst_36 = arith.constant dense<0.000000e+00> : vector<128xf32>
    %60 = vector.multi_reduction <add>, %22, %cst_36 [0] : vector<16x128xf32> to vector<128xf32>
    %61 = vector.shape_cast %60 : vector<128xf32> to vector<1x128xf32>
    %cst_37 = arith.constant dense<0.000000e+00> : vector<1x128xf32>
    %62 = tpu.matmul %61, %59, %cst_37 {dimension_numbers = #tpu.dot_dimension_numbers<[1], [0], [0], [1], [0, 0, 1, 1], [], []>} : vector<1x128xf32>, vector<128x128xf32>, vector<1x128xf32> -> vector<1x128xf32>
    %cst_38 = arith.constant 0.001953125 : f32
    %63 = vector.broadcast %cst_38 : f32 to vector<1x128xf32>
    %64 = arith.mulf %62, %63 : vector<1x128xf32>
    %65 = vector.broadcast %64 : vector<1x128xf32> to vector<16x128xf32>
    %66 = arith.subf %22, %65 : vector<16x128xf32>
    %67 = arith.mulf %66, %66 : vector<16x128xf32>
    %cst_39 = arith.constant dense<0.000000e+00> : vector<128xf32>
    %68 = vector.multi_reduction <add>, %67, %cst_39 [0] : vector<16x128xf32> to vector<128xf32>
    %69 = vector.shape_cast %68 : vector<128xf32> to vector<1x128xf32>
    %cst_40 = arith.constant dense<0.000000e+00> : vector<1x128xf32>
    %70 = tpu.matmul %69, %59, %cst_40 {dimension_numbers = #tpu.dot_dimension_numbers<[1], [0], [0], [1], [0, 0, 1, 1], [], []>} : vector<1x128xf32>, vector<128x128xf32>, vector<1x128xf32> -> vector<1x128xf32>
    %cst_41 = arith.constant 0.001953125 : f32
    %71 = vector.broadcast %cst_41 : f32 to vector<1x128xf32>
    %72 = arith.mulf %70, %71 : vector<1x128xf32>
    %c0_42 = arith.constant 0 : index
    %c0_43 = arith.constant 0 : index
    %73 = vector.load %arg4[%c0_42, %c0_43] : memref<1x128xf32, #tpu.memory_space<vmem>>, vector<1x128xf32>
    %cst_44 = arith.constant 9.99999974E-6 : f32
    %74 = vector.broadcast %cst_44 : f32 to vector<1x128xf32>
    %75 = arith.addf %72, %74 : vector<1x128xf32>
    %76 = math.rsqrt %75 : vector<1x128xf32>
    %77 = arith.mulf %73, %76 : vector<1x128xf32>
    %c0_45 = arith.constant 0 : index
    %c0_46 = arith.constant 0 : index
    %78 = vector.load %arg5[%c0_45, %c0_46] : memref<1x128xf32, #tpu.memory_space<vmem>>, vector<1x128xf32>
    %79 = arith.mulf %64, %77 : vector<1x128xf32>
    %80 = arith.subf %78, %79 : vector<1x128xf32>
    %81 = vector.broadcast %77 : vector<1x128xf32> to vector<16x128xf32>
    %82 = arith.mulf %22, %81 : vector<16x128xf32>
    %83 = vector.broadcast %80 : vector<1x128xf32> to vector<16x128xf32>
    %84 = arith.addf %82, %83 : vector<16x128xf32>
    %cst_47 = arith.constant 0.000000e+00 : f32
    %85 = vector.broadcast %cst_47 : f32 to vector<16x128xf32>
    %86 = arith.cmpf ogt, %84, %85 : vector<16x128xf32>
    %cst_48 = arith.constant 0.00999999977 : f32
    %87 = vector.broadcast %cst_48 : f32 to vector<16x128xf32>
    %88 = arith.mulf %87, %84 : vector<16x128xf32>
    %89 = arith.select %86, %84, %88 : vector<16x128xi1>, vector<16x128xf32>
    %90 = vector.shape_cast %89 : vector<16x128xf32> to vector<2x8x128xf32>
    %c0_49 = arith.constant 0 : index
    %c1_50 = arith.constant 1 : index
    %c0_51 = arith.constant 0 : index
    %91 = vector.load %arg7[%c0_49, %c1_50, %c0_51] : memref<2x10x128xf32, #tpu.memory_space<vmem>>, vector<2x8x128xf32>
    tpu.vector_store %arg7[%c0_49, %c1_50, %c0_51], %90 {strides = array<i32>} : memref<2x10x128xf32, #tpu.memory_space<vmem>>, vector<2x8x128xf32>,
    %c0_52 = arith.constant 0 : index
    %c0_53 = arith.constant 0 : index
    %c0_54 = arith.constant 0 : index
    %92 = vector.load %arg7[%c0_52, %c0_53, %c0_54] : memref<2x10x128xf32, #tpu.memory_space<vmem>>, vector<2x8x128xf32>
    %93 = vector.shape_cast %92 : vector<2x8x128xf32> to vector<16x128xf32>
    %c0_55 = arith.constant 0 : index
    %c0_56 = arith.constant 0 : index
    %c0_57 = arith.constant 0 : index
    %94 = vector.load %arg2[%c0_55, %c0_56, %c0_57] : memref<3x128x128xf32, #tpu.memory_space<vmem>>, vector<1x128x128xf32>
    %95 = vector.shape_cast %94 : vector<1x128x128xf32> to vector<128x128xf32>
    %cst_58 = arith.constant dense<0.000000e+00> : vector<16x128xf32>
    %96 = tpu.matmul %93, %95, %cst_58 {dimension_numbers = #tpu.dot_dimension_numbers<[1], [0], [0], [1], [0, 0, 1, 1], [], []>} : vector<16x128xf32>, vector<128x128xf32>, vector<16x128xf32> -> vector<16x128xf32>
    %c0_59 = arith.constant 0 : index
    %c1_60 = arith.constant 1 : index
    %c0_61 = arith.constant 0 : index
    %97 = vector.load %arg7[%c0_59, %c1_60, %c0_61] : memref<2x10x128xf32, #tpu.memory_space<vmem>>, vector<2x8x128xf32>
    %98 = vector.shape_cast %97 : vector<2x8x128xf32> to vector<16x128xf32>
    %c1_62 = arith.constant 1 : index
    %c0_63 = arith.constant 0 : index
    %c0_64 = arith.constant 0 : index
    %99 = vector.load %arg2[%c1_62, %c0_63, %c0_64] : memref<3x128x128xf32, #tpu.memory_space<vmem>>, vector<1x128x128xf32>
    %100 = vector.shape_cast %99 : vector<1x128x128xf32> to vector<128x128xf32>
    %cst_65 = arith.constant dense<0.000000e+00> : vector<16x128xf32>
    %101 = tpu.matmul %98, %100, %cst_65 {dimension_numbers = #tpu.dot_dimension_numbers<[1], [0], [0], [1], [0, 0, 1, 1], [], []>} : vector<16x128xf32>, vector<128x128xf32>, vector<16x128xf32> -> vector<16x128xf32>
    %102 = arith.addf %96, %101 : vector<16x128xf32>
    %c0_66 = arith.constant 0 : index
    %c2_67 = arith.constant 2 : index
    %c0_68 = arith.constant 0 : index
    %103 = vector.load %arg7[%c0_66, %c2_67, %c0_68] : memref<2x10x128xf32, #tpu.memory_space<vmem>>, vector<2x8x128xf32>
    %104 = vector.shape_cast %103 : vector<2x8x128xf32> to vector<16x128xf32>
    %c2_69 = arith.constant 2 : index
    %c0_70 = arith.constant 0 : index
    %c0_71 = arith.constant 0 : index
    %105 = vector.load %arg2[%c2_69, %c0_70, %c0_71] : memref<3x128x128xf32, #tpu.memory_space<vmem>>, vector<1x128x128xf32>
    %106 = vector.shape_cast %105 : vector<1x128x128xf32> to vector<128x128xf32>
    %cst_72 = arith.constant dense<0.000000e+00> : vector<16x128xf32>
    %107 = tpu.matmul %104, %106, %cst_72 {dimension_numbers = #tpu.dot_dimension_numbers<[1], [0], [0], [1], [0, 0, 1, 1], [], []>} : vector<16x128xf32>, vector<128x128xf32>, vector<16x128xf32> -> vector<16x128xf32>
    %108 = arith.addf %102, %107 : vector<16x128xf32>
    %c0_73 = arith.constant 0 : index
    %c0_74 = arith.constant 0 : index
    %109 = vector.load %arg3[%c0_73, %c0_74] : memref<1x128xf32, #tpu.memory_space<vmem>>, vector<1x128xf32>
    %110 = vector.broadcast %109 : vector<1x128xf32> to vector<16x128xf32>
    %111 = arith.addf %108, %110 : vector<16x128xf32>
    %112 = arith.addf %3, %111 : vector<16x128xf32>
    %cst_75 = arith.constant 0.000000e+00 : f32
    %113 = vector.broadcast %cst_75 : f32 to vector<16x128xf32>
    %114 = arith.cmpf ogt, %112, %113 : vector<16x128xf32>
    %cst_76 = arith.constant 0.00999999977 : f32
    %115 = vector.broadcast %cst_76 : f32 to vector<16x128xf32>
    %116 = arith.mulf %115, %112 : vector<16x128xf32>
    %117 = arith.select %114, %112, %116 : vector<16x128xi1>, vector<16x128xf32>
    %118 = vector.shape_cast %117 : vector<16x128xf32> to vector<2x8x128xf32>
    %c0_77 = arith.constant 0 : index
    %c0_78 = arith.constant 0 : index
    %c0_79 = arith.constant 0 : index
    %119 = vector.load %arg6[%c0_77, %c0_78, %c0_79] : memref<2x8x128xf32, #tpu.memory_space<vmem>>, vector<2x8x128xf32>
    tpu.vector_store %arg6[%c0_77, %c0_78, %c0_79], %118 {strides = array<i32>} : memref<2x8x128xf32, #tpu.memory_space<vmem>>, vector<2x8x128xf32>,
    return
  }
}

</mosaic_0001>

<llo_original>
// kernel: tile.18
$region0: #{tile.18}
  #allocation0 [shape = 's32[1]{0}', space=sflag, size = 0x4, scoped, tag = 'scoped memory for tile.18']
  %s0 = inlined_call_operand.vmem [shape: f32[4], index: 0, kind: input, shape index: {}]
  %s1 = inlined_call_operand.vmem [shape: f32[32,4], index: 1, kind: output, shape index: {}]
  // Predicated region
  $region2: #{tile.18} parent=0 // pred_check
    _
  $region3: #{tile.18} parent=0 // pred_check_branch
    %3 = sbr.rel (0) target = $region5
  $region4: #{tile.18} parent=0 // pred_region
    _
  $region5: #{tile.18} parent=0 // pred_fallthru
    _
  %v4 = vld [vmem:[%s0] ss:$0 sm:$0xff]
  %5 = vst [vmem:[%s1] sm:$0xff] %v4
  %s6 = scalar_lea.vmem %s1, 8
  %7 = vst [vmem:[%s6] sm:$0xff] %v4
  %s8 = scalar_lea.vmem %s1, 16
  %9 = vst [vmem:[%s8] sm:$0xff] %v4
  %s10 = scalar_lea.vmem %s1, 24
  %11 = vst [vmem:[%s10] sm:$0xff] %v4

// kernel: tile.19
$region0: #{tile.19}
  %s0 = inlined_call_operand.vmem [shape: f32[32,4], index: 0, kind: input, shape index: {}]
  %s1 = inlined_call_operand.vmem [shape: f32[1,128], index: 1, kind: output, shape index: {}]
  $region1: #{tile.19} parent=0
    #allocation0 [shape = 'u8[4096]{0}', space=vmem, size = 0x1000, scoped, tag = 'scoped mem for output reshape']
    %v2 = vld [vmem:[%s0] sm:$0x1]
    %vm3 = vcmask 31744
    %4 = vst.msk [vmem:[#allocation0] sm:$0x1] %vm3, %v2
    %s5 = scalar_lea.vmem %s0, 31
    %v6 = vld [vmem:[%s5] sm:$0x1]
    %7 = vrot.lane.b32.xlu0 %v6, 124
    %v8 = vpop.permute.xlu0 %7
    %vm9 = vcmask 1048544
    %10 = vst.msk [vmem:[#allocation0] sm:$0x1] %vm9, %v8
    %s11 = scalar_lea.vmem %s0, 30
    %v12 = vld [vmem:[%s11] sm:$0x1]
    %13 = vrot.lane.b32.xlu0 %v12, 120
    %v14 = vpop.permute.xlu0 %13
    %vm15 = vcmask 1015744
    %16 = vst.msk [vmem:[#allocation0] sm:$0x1] %vm15, %v14
    %s17 = scalar_lea.vmem %s0, 29
    %v18 = vld [vmem:[%s17] sm:$0x1]
    %19 = vrot.lane.b32.xlu0 %v18, 116
    %v20 = vpop.permute.xlu0 %19
    %vm21 = vcmask 982944
    %22 = vst.msk [vmem:[#allocation0] sm:$0x1] %vm21, %v20
    %s23 = scalar_lea.vmem %s0, 28
    %v24 = vld [vmem:[%s23] sm:$0x1]
    %25 = vrot.lane.b32.xlu0 %v24, 112
    %v26 = vpop.permute.xlu0 %25
    %vm27 = vcmask 950144
    %28 = vst.msk [vmem:[#allocation0] sm:$0x1] %vm27, %v26
    %s29 = scalar_lea.vmem %s0, 27
    %v30 = vld [vmem:[%s29] sm:$0x1]
    %31 = vrot.lane.b32.xlu0 %v30, 108
    %v32 = vpop.permute.xlu0 %31
    %vm33 = vcmask 917344
    %34 = vst.msk [vmem:[#allocation0] sm:$0x1] %vm33, %v32
    %s35 = scalar_lea.vmem %s0, 26
    %v36 = vld [vmem:[%s35] sm:$0x1]
    %37 = vrot.lane.b32.xlu0 %v36, 104
    %v38 = vpop.permute.xlu0 %37
    %vm39 = vcmask 884544
    %40 = vst.msk [vmem:[#allocation0] sm:$0x1] %vm39, %v38
    %s41 = scalar_lea.vmem %s0, 25
    %v42 = vld [vmem:[%s41] sm:$0x1]
    %43 = vrot.lane.b32.xlu0 %v42, 100
    %v44 = vpop.permute.xlu0 %43
    %vm45 = vcmask 851744
    %46 = vst.msk [vmem:[#allocation0] sm:$0x1] %vm45, %v44
    %s47 = scalar_lea.vmem %s0, 24
    %v48 = vld [vmem:[%s47] sm:$0x1]
    %49 = vrot.lane.b32.xlu0 %v48, 96
    %v50 = vpop.permute.xlu0 %49
    %vm51 = vcmask 818944
    %52 = vst.msk [vmem:[#allocation0] sm:$0x1] %vm51, %v50
    %s53 = scalar_lea.vmem %s0, 23
    %v54 = vld [vmem:[%s53] sm:$0x1]
    %55 = vrot.lane.b32.xlu0 %v54, 92
    %v56 = vpop.permute.xlu0 %55
    %vm57 = vcmask 786144
    %58 = vst.msk [vmem:[#allocation0] sm:$0x1] %vm57, %v56
    %s59 = scalar_lea.vmem %s0, 22
    %v60 = vld [vmem:[%s59] sm:$0x1]
    %61 = vrot.lane.b32.xlu0 %v60, 88
    %v62 = vpop.permute.xlu0 %61
    %vm63 = vcmask 753344
    %64 = vst.msk [vmem:[#allocation0] sm:$0x1] %vm63, %v62
    %s65 = scalar_lea.vmem %s0, 21
    %v66 = vld [vmem:[%s65] sm:$0x1]
    %67 = vrot.lane.b32.xlu0 %v66, 84
    %v68 = vpop.permute.xlu0 %67
    %vm69 = vcmask 720544
    %70 = vst.msk [vmem:[#allocation0] sm:$0x1] %vm69, %v68
    %s71 = scalar_lea.vmem %s0, 20
    %v72 = vld [vmem:[%s71] sm:$0x1]
    %73 = vrot.lane.b32.xlu0 %v72, 80
    %v74 = vpop.permute.xlu0 %73
    %vm75 = vcmask 687744
    %76 = vst.msk [vmem:[#allocation0] sm:$0x1] %vm75, %v74
    %s77 = scalar_lea.vmem %s0, 19
    %v78 = vld [vmem:[%s77] sm:$0x1]
    %79 = vrot.lane.b32.xlu0 %v78, 76
    %v80 = vpop.permute.xlu0 %79
    %vm81 = vcmask 654944
    %82 = vst.msk [vmem:[#allocation0] sm:$0x1] %vm81, %v80
    %s83 = scalar_lea.vmem %s0, 18
    %v84 = vld [vmem:[%s83] sm:$0x1]
    %85 = vrot.lane.b32.xlu0 %v84, 72
    %v86 = vpop.permute.xlu0 %85
    %vm87 = vcmask 622144
    %88 = vst.msk [vmem:[#allocation0] sm:$0x1] %vm87, %v86
    %s89 = scalar_lea.vmem %s0, 17
    %v90 = vld [vmem:[%s89] sm:$0x1]
    %91 = vrot.lane.b32.xlu0 %v90, 68
    %v92 = vpop.permute.xlu0 %91
    %vm93 = vcmask 589344
    %94 = vst.msk [vmem:[#allocation0] sm:$0x1] %vm93, %v92
    %s95 = scalar_lea.vmem %s0, 16
    %v96 = vld [vmem:[%s95] sm:$0x1]
    %97 = vrot.lane.b32.xlu0 %v96, 64
    %v98 = vpop.permute.xlu0 %97
    %vm99 = vcmask 556544
    %100 = vst.msk [vmem:[#allocation0] sm:$0x1] %vm99, %v98
    %s101 = scalar_lea.vmem %s0, 15
    %v102 = vld [vmem:[%s101] sm:$0x1]
    %103 = vrot.lane.b32.xlu0 %v102, 60
    %v104 = vpop.permute.xlu0 %103
    %vm105 = vcmask 523744
    %106 = vst.msk [vmem:[#allocation0] sm:$0x1] %vm105, %v104
    %s107 = scalar_lea.vmem %s0, 14
    %v108 = vld [vmem:[%s107] sm:$0x1]
    %109 = vrot.lane.b32.xlu0 %v108, 56
    %v110 = vpop.permute.xlu0 %109
    %vm111 = vcmask 490944
    %112 = vst.msk [vmem:[#allocation0] sm:$0x1] %vm111, %v110
    %s113 = scalar_lea.vmem %s0, 13
    %v114 = vld [vmem:[%s113] sm:$0x1]
    %115 = vrot.lane.b32.xlu0 %v114, 52
    %v116 = vpop.permute.xlu0 %115
    %vm117 = vcmask 458144
    %118 = vst.msk [vmem:[#allocation0] sm:$0x1] %vm117, %v116
    %s119 = scalar_lea.vmem %s0, 12
    %v120 = vld [vmem:[%s119] sm:$0x1]
    %121 = vrot.lane.b32.xlu0 %v120, 48
    %v122 = vpop.permute.xlu0 %121
    %vm123 = vcmask 425344
    %124 = vst.msk [vmem:[#allocation0] sm:$0x1] %vm123, %v122
    %s125 = scalar_lea.vmem %s0, 11
    %v126 = vld [vmem:[%s125] sm:$0x1]
    %127 = vrot.lane.b32.xlu0 %v126, 44
    %v128 = vpop.permute.xlu0 %127
    %vm129 = vcmask 392544
    %130 = vst.msk [vmem:[#allocation0] sm:$0x1] %vm129, %v128
    %s131 = scalar_lea.vmem %s0, 10
    %v132 = vld [vmem:[%s131] sm:$0x1]
    %133 = vrot.lane.b32.xlu0 %v132, 40
    %v134 = vpop.permute.xlu0 %133
    %vm135 = vcmask 359744
    %136 = vst.msk [vmem:[#allocation0] sm:$0x1] %vm135, %v134
    %s137 = scalar_lea.vmem %s0, 9
    %v138 = vld [vmem:[%s137] sm:$0x1]
    %139 = vrot.lane.b32.xlu0 %v138, 36
    %v140 = vpop.permute.xlu0 %139
    %vm141 = vcmask 326944
    %142 = vst.msk [vmem:[#allocation0] sm:$0x1] %vm141, %v140
    %s143 = scalar_lea.vmem %s0, 8
    %v144 = vld [vmem:[%s143] sm:$0x1]
    %145 = vrot.lane.b32.xlu0 %v144, 32
    %v146 = vpop.permute.xlu0 %145
    %vm147 = vcmask 294144
    %148 = vst.msk [vmem:[#allocation0] sm:$0x1] %vm147, %v146
    %s149 = scalar_lea.vmem %s0, 7
    %v150 = vld [vmem:[%s149] sm:$0x1]
    %151 = vrot.lane.b32.xlu0 %v150, 28
    %v152 = vpop.permute.xlu0 %151
    %vm153 = vcmask 261344
    %154 = vst.msk [vmem:[#allocation0] sm:$0x1] %vm153, %v152
    %s155 = scalar_lea.vmem %s0, 6
    %v156 = vld [vmem:[%s155] sm:$0x1]
    %157 = vrot.lane.b32.xlu0 %v156, 24
    %v158 = vpop.permute.xlu0 %157
    %vm159 = vcmask 228544
    %160 = vst.msk [vmem:[#allocation0] sm:$0x1] %vm159, %v158
    %s161 = scalar_lea.vmem %s0, 5
    %v162 = vld [vmem:[%s161] sm:$0x1]
    %163 = vrot.lane.b32.xlu0 %v162, 20
    %v164 = vpop.permute.xlu0 %163
    %vm165 = vcmask 195744
    %166 = vst.msk [vmem:[#allocation0] sm:$0x1] %vm165, %v164
    %s167 = scalar_lea.vmem %s0, 4
    %v168 = vld [vmem:[%s167] sm:$0x1]
    %169 = vrot.lane.b32.xlu0 %v168, 16
    %v170 = vpop.permute.xlu0 %169
    %vm171 = vcmask 162944
    %172 = vst.msk [vmem:[#allocation0] sm:$0x1] %vm171, %v170
    %s173 = scalar_lea.vmem %s0, 3
    %v174 = vld [vmem:[%s173] sm:$0x1]
    %175 = vrot.lane.b32.xlu0 %v174, 12
    %v176 = vpop.permute.xlu0 %175
    %vm177 = vcmask 130144
    %178 = vst.msk [vmem:[#allocation0] sm:$0x1] %vm177, %v176
    %s179 = scalar_lea.vmem %s0, 2
    %v180 = vld [vmem:[%s179] sm:$0x1]
    %181 = vrot.lane.b32.xlu0 %v180, 8
    %v182 = vpop.permute.xlu0 %181
    %vm183 = vcmask 97344
    %184 = vst.msk [vmem:[#allocation0] sm:$0x1] %vm183, %v182
    %s185 = scalar_lea.vmem %s0, 1
    %v186 = vld [vmem:[%s185] sm:$0x1]
    %187 = vrot.lane.b32.xlu0 %v186, 4
    %v188 = vpop.permute.xlu0 %187
    %vm189 = vcmask 64544
    %190 = vst.msk [vmem:[#allocation0] sm:$0x1] %vm189, %v188
    %s192 = sshllo.u32 0, 1
    %v194 = vld [vmem:[#allocation0] sm:%s192]
    %s195 = sshllo.u32 0, 1
    %196 = vst [vmem:[%s1] sm:%s195] %v194

// kernel: resnet_block_forward.1
$region0: #{resnet_block_forward.1}
  #allocation0 [shape = 'u32[]', space=smem, size = 0x4, offset = 0x4, fixed_abs, tag = 'smem constant byte address 0x4 - core index']
  #allocation1 [shape = 'u32[144,128]{1,0:T(1,128)}', space=vmem, size = 0x12000, scoped, tag = 'internal scratch']
  #allocation2 [shape = 'f32[2,10,128]{2,1,0:T(8,128)}', space=vmem, size = 0x4000, scoped, tag = 'scratch operand']
  %s0 = inlined_call_operand.vmem [shape: f32[2,8,128], index: 0, kind: input, shape index: {}]
  %s1 = inlined_call_operand.vmem [shape: f32[3,128,128], index: 1, kind: input, shape index: {}]
  %s2 = inlined_call_operand.vmem [shape: f32[3,128,128], index: 2, kind: input, shape index: {}]
  %s3 = inlined_call_operand.vmem [shape: f32[1,128], index: 3, kind: input, shape index: {}]
  %s4 = inlined_call_operand.vmem [shape: f32[1,128], index: 4, kind: input, shape index: {}]
  %s5 = inlined_call_operand.vmem [shape: f32[1,128], index: 5, kind: input, shape index: {}]
  %s6 = inlined_call_operand.vmem [shape: f32[2,8,128], index: 6, kind: output, shape index: {}]
  %s7 = sld [smem:[#allocation0]]
  $region34: #{resnet_block_forward.1} parent=0
    _
  %s9 = ssub.s32 1, %s7
  %s10 = scalar_select 0, %s9, %s7
  // Predicated region
  $region2: #{resnet_block_forward.1} parent=0 // pred_check
    _
  $region3: #{resnet_block_forward.1} parent=0 // pred_check_branch
    %12 = sbr.rel (0) target = $region5
  $region4: #{resnet_block_forward.1} parent=0 // pred_region
    _
  $region5: #{resnet_block_forward.1} parent=0 // pred_fallthru
    _
  // Predicated region
  $region6: #{resnet_block_forward.1} parent=0 // pred_check
    _
  $region7: #{resnet_block_forward.1} parent=0 // pred_check_branch
    %14 = sbr.rel (0) target = $region9
  $region8: #{resnet_block_forward.1} parent=0 // pred_region
    _
  $region9: #{resnet_block_forward.1} parent=0 // pred_fallthru
    _
  // Predicated region
  $region10: #{resnet_block_forward.1} parent=0 // pred_check
    _
  $region11: #{resnet_block_forward.1} parent=0 // pred_check_branch
    %16 = sbr.rel (0) target = $region13
  $region12: #{resnet_block_forward.1} parent=0 // pred_region
    _
  $region13: #{resnet_block_forward.1} parent=0 // pred_fallthru
    _
  // Predicated region
  $region14: #{resnet_block_forward.1} parent=0 // pred_check
    _
  $region15: #{resnet_block_forward.1} parent=0 // pred_check_branch
    %18 = sbr.rel (0) target = $region17
  $region16: #{resnet_block_forward.1} parent=0 // pred_region
    _
  $region17: #{resnet_block_forward.1} parent=0 // pred_fallthru
    _
  // Predicated region
  $region18: #{resnet_block_forward.1} parent=0 // pred_check
    _
  $region19: #{resnet_block_forward.1} parent=0 // pred_check_branch
    %20 = sbr.rel (0) target = $region21
  $region20: #{resnet_block_forward.1} parent=0 // pred_region
    _
  $region21: #{resnet_block_forward.1} parent=0 // pred_fallthru
    _
  // Predicated region
  $region22: #{resnet_block_forward.1} parent=0 // pred_check
    _
  $region23: #{resnet_block_forward.1} parent=0 // pred_check_branch
    %22 = sbr.rel (0) target = $region25
  $region24: #{resnet_block_forward.1} parent=0 // pred_region
    _
  $region25: #{resnet_block_forward.1} parent=0 // pred_fallthru
    _
  %23 = vst [vmem:[#allocation2] sm:$0xff] 0.0
  %24 = vst [vmem:[#allocation2 + $0x8] sm:$0x3] 0.0
  %25 = vst [vmem:[#allocation2 + $0x10] sm:$0xff] 0.0
  %26 = vst [vmem:[#allocation2 + $0x18] sm:$0x3] 0.0
  %v27 = vld [vmem:[%s0] sm:$0xff]
  %v28 = vld [vmem:[%s0 + $0x8] sm:$0xff]
  %29 = vst [vmem:[#allocation2 + $0x1] sm:$0xff] %v27
  %30 = vst [vmem:[#allocation2 + $0x11] sm:$0xff] %v28
  %v31 = vld [vmem:[#allocation2] sm:$0xff]
  %v32 = vld [vmem:[#allocation2 + $0x10] sm:$0xff]
  %v33 = vld [vmem:[%s1] sm:$0xff]
  %v34 = vld [vmem:[%s1 + $0x8] sm:$0xff]
  %v35 = vld [vmem:[%s1 + $0x10] sm:$0xff]
  %v36 = vld [vmem:[%s1 + $0x18] sm:$0xff]
  %v37 = vld [vmem:[%s1 + $0x20] sm:$0xff]
  %v38 = vld [vmem:[%s1 + $0x28] sm:$0xff]
  %v39 = vld [vmem:[%s1 + $0x30] sm:$0xff]
  %v40 = vld [vmem:[%s1 + $0x38] sm:$0xff]
  %v41 = vld [vmem:[%s1 + $0x40] sm:$0xff]
  %v42 = vld [vmem:[%s1 + $0x48] sm:$0xff]
  %v43 = vld [vmem:[%s1 + $0x50] sm:$0xff]
  %v44 = vld [vmem:[%s1 + $0x58] sm:$0xff]
  %v45 = vld [vmem:[%s1 + $0x60] sm:$0xff]
  %v46 = vld [vmem:[%s1 + $0x68] sm:$0xff]
  %v47 = vld [vmem:[%s1 + $0x70] sm:$0xff]
  %v48 = vld [vmem:[%s1 + $0x78] sm:$0xff]
  %v49 = vld [vmem:[#allocation2 + $0x1] sm:$0xff]
  %v50 = vld [vmem:[#allocation2 + $0x11] sm:$0xff]
  %s51 = scalar_lea.vmem %s1, 128
  %v52 = vld [vmem:[%s51] sm:$0xff]
  %v53 = vld [vmem:[%s51 + $0x8] sm:$0xff]
  %v54 = vld [vmem:[%s51 + $0x10] sm:$0xff]
  %v55 = vld [vmem:[%s51 + $0x18] sm:$0xff]
  %v56 = vld [vmem:[%s51 + $0x20] sm:$0xff]
  %v57 = vld [vmem:[%s51 + $0x28] sm:$0xff]
  %v58 = vld [vmem:[%s51 + $0x30] sm:$0xff]
  %v59 = vld [vmem:[%s51 + $0x38] sm:$0xff]
  %v60 = vld [vmem:[%s51 + $0x40] sm:$0xff]
  %v61 = vld [vmem:[%s51 + $0x48] sm:$0xff]
  %v62 = vld [vmem:[%s51 + $0x50] sm:$0xff]
  %v63 = vld [vmem:[%s51 + $0x58] sm:$0xff]
  %v64 = vld [vmem:[%s51 + $0x60] sm:$0xff]
  %v65 = vld [vmem:[%s51 + $0x68] sm:$0xff]
  %v66 = vld [vmem:[%s51 + $0x70] sm:$0xff]
  %v67 = vld [vmem:[%s51 + $0x78] sm:$0xff]
  %68 = vmatprep.subr.mxu0 0.0
  %69 = vmatpush1.msra.mxu0 %v52
  %70 = vmatprep.subr.mxu0 0.0
  %71 = vmatpush1.msra.mxu0 %v53
  %72 = vmatprep.subr.mxu0 0.0
  %73 = vmatpush1.msra.mxu0 %v54
  %74 = vmatprep.subr.mxu0 0.0
  %75 = vmatpush1.msra.mxu0 %v55
  %76 = vmatprep.subr.mxu0 0.0
  %77 = vmatpush1.msra.mxu0 %v56
  %78 = vmatprep.subr.mxu0 0.0
  %79 = vmatpush1.msra.mxu0 %v57
  %80 = vmatprep.subr.mxu0 0.0
  %81 = vmatpush1.msra.mxu0 %v58
  %82 = vmatprep.subr.mxu0 0.0
  %83 = vmatpush1.msra.mxu0 %v59
  %84 = vmatprep.subr.mxu0 0.0
  %85 = vmatpush1.msra.mxu0 %v60
  %86 = vmatprep.subr.mxu0 0.0
  %87 = vmatpush1.msra.mxu0 %v61
  %88 = vmatprep.subr.mxu0 0.0
  %89 = vmatpush1.msra.mxu0 %v62
  %90 = vmatprep.subr.mxu0 0.0
  %91 = vmatpush1.msra.mxu0 %v63
  %92 = vmatprep.subr.mxu0 0.0
  %93 = vmatpush1.msra.mxu0 %v64
  %94 = vmatprep.subr.mxu0 0.0
  %95 = vmatpush1.msra.mxu0 %v65
  %96 = vmatprep.subr.mxu0 0.0
  %97 = vmatpush1.msra.mxu0 %v66
  %98 = vmatprep.subr.mxu0 0.0
  %99 = vmatpush1.msra.mxu0 %v67
  %100 = vmatprep.subr.mxu0 0.0
  %101 = vmatpush1.msra.mxu0 0.0
  %102 = vmatprep.subr.mxu0 0.0
  %103 = vmatpush1.msra.mxu0 0.0
  %104 = vmatprep.subr.mxu0 0.0
  %105 = vmatpush1.msra.mxu0 0.0
  %106 = vmatprep.subr.mxu0 0.0
  %107 = vmatpush1.msra.mxu0 0.0
  %108 = vmatprep.subr.mxu0 0.0
  %109 = vmatpush1.msra.mxu0 0.0
  %110 = vmatprep.subr.mxu0 0.0
  %111 = vmatpush1.msra.mxu0 0.0
  %112 = vmatprep.subr.mxu0 0.0
  %113 = vmatpush1.msra.mxu0 0.0
  %114 = vmatprep.subr.mxu0 0.0
  %115 = vmatpush1.msra.mxu0 0.0
  %116 = vmatprep.subr.mxu0 0.0
  %117 = vmatpush1.msra.mxu0 0.0
  %118 = vmatprep.subr.mxu0 0.0
  %119 = vmatpush1.msra.mxu0 0.0
  %120 = vmatprep.subr.mxu0 0.0
  %121 = vmatpush1.msra.mxu0 0.0
  %122 = vmatprep.subr.mxu0 0.0
  %123 = vmatpush1.msra.mxu0 0.0
  %124 = vmatprep.subr.mxu0 0.0
  %125 = vmatpush1.msra.mxu0 0.0
  %126 = vmatprep.subr.mxu0 0.0
  %127 = vmatpush1.msra.mxu0 0.0
  %128 = vmatprep.subr.mxu0 0.0
  %129 = vmatpush1.msra.mxu0 0.0
  %130 = vmatprep.subr.mxu0 0.0
  %131 = vmatpush1.msra.mxu0 0.0
  %132 = vmatprep.mubr.f32.mxu0 0.0
  %133 = vmatmul.mubr.f32.gmra.mrb[0].mxu0 %v49
  %v134 = vpop.f32.mrb[0].mxu0
  %v135 = vadd.f32 0.0, %v134
  %v136 = vpop.f32.mrb[0].mxu0
  %137 = vmatprep.mubr.f32.mxu0 0.0
  %138 = vmatmul.mubr.f32.gmra.mrb[0].mxu0 %v50
  %v139 = vpop.f32.mrb[0].mxu0
  %v140 = vadd.f32 0.0, %v139
  %v141 = vpop.f32.mrb[0].mxu0
  %142 = vdwg.mxu0
  %143 = vmatprep.subr.mxu0 0.0
  %144 = vmatpush1.msra.mxu0 %v33
  %145 = vmatprep.subr.mxu0 0.0
  %146 = vmatpush1.msra.mxu0 %v34
  %147 = vmatprep.subr.mxu0 0.0
  %148 = vmatpush1.msra.mxu0 %v35
  %149 = vmatprep.subr.mxu0 0.0
  %150 = vmatpush1.msra.mxu0 %v36
  %151 = vmatprep.subr.mxu0 0.0
  %152 = vmatpush1.msra.mxu0 %v37
  %153 = vmatprep.subr.mxu0 0.0
  %154 = vmatpush1.msra.mxu0 %v38
  %155 = vmatprep.subr.mxu0 0.0
  %156 = vmatpush1.msra.mxu0 %v39
  %157 = vmatprep.subr.mxu0 0.0
  %158 = vmatpush1.msra.mxu0 %v40
  %159 = vmatprep.subr.mxu0 0.0
  %160 = vmatpush1.msra.mxu0 %v41
  %161 = vmatprep.subr.mxu0 0.0
  %162 = vmatpush1.msra.mxu0 %v42
  %163 = vmatprep.subr.mxu0 0.0
  %164 = vmatpush1.msra.mxu0 %v43
  %165 = vmatprep.subr.mxu0 0.0
  %166 = vmatpush1.msra.mxu0 %v44
  %167 = vmatprep.subr.mxu0 0.0
  %168 = vmatpush1.msra.mxu0 %v45
  %169 = vmatprep.subr.mxu0 0.0
  %170 = vmatpush1.msra.mxu0 %v46
  %171 = vmatprep.subr.mxu0 0.0
  %172 = vmatpush1.msra.mxu0 %v47
  %173 = vmatprep.subr.mxu0 0.0
  %174 = vmatpush1.msra.mxu0 %v48
  %175 = vmatprep.subr.mxu0 0.0
  %176 = vmatpush1.msra.mxu0 0.0
  %177 = vmatprep.subr.mxu0 0.0
  %178 = vmatpush1.msra.mxu0 0.0
  %179 = vmatprep.subr.mxu0 0.0
  %180 = vmatpush1.msra.mxu0 0.0
  %181 = vmatprep.subr.mxu0 0.0
  %182 = vmatpush1.msra.mxu0 0.0
  %183 = vmatprep.subr.mxu0 0.0
  %184 = vmatpush1.msra.mxu0 0.0
  %185 = vmatprep.subr.mxu0 0.0
  %186 = vmatpush1.msra.mxu0 0.0
  %187 = vmatprep.subr.mxu0 0.0
  %188 = vmatpush1.msra.mxu0 0.0
  %189 = vmatprep.subr.mxu0 0.0
  %190 = vmatpush1.msra.mxu0 0.0
  %191 = vmatprep.subr.mxu0 0.0
  %192 = vmatpush1.msra.mxu0 0.0
  %193 = vmatprep.subr.mxu0 0.0
  %194 = vmatpush1.msra.mxu0 0.0
  %195 = vmatprep.subr.mxu0 0.0
  %196 = vmatpush1.msra.mxu0 0.0
  %197 = vmatprep.subr.mxu0 0.0
  %198 = vmatpush1.msra.mxu0 0.0
  %199 = vmatprep.subr.mxu0 0.0
  %200 = vmatpush1.msra.mxu0 0.0
  %201 = vmatprep.subr.mxu0 0.0
  %202 = vmatpush1.msra.mxu0 0.0
  %203 = vmatprep.subr.mxu0 0.0
  %204 = vmatpush1.msra.mxu0 0.0
  %205 = vmatprep.subr.mxu0 0.0
  %206 = vmatpush1.msra.mxu0 0.0
  %207 = vmatprep.mubr.f32.mxu0 0.0
  %208 = vmatmul.mubr.f32.gmra.mrb[0].mxu0 %v31
  %v209 = vpop.f32.mrb[0].mxu0
  %v210 = vadd.f32 %v135, %v209
  %v211 = vpop.f32.mrb[0].mxu0
  %212 = vmatprep.mubr.f32.mxu0 0.0
  %213 = vmatmul.mubr.f32.gmra.mrb[0].mxu0 %v32
  %v214 = vpop.f32.mrb[0].mxu0
  %v215 = vadd.f32 %v140, %v214
  %v216 = vpop.f32.mrb[0].mxu0
  %217 = vdwg.mxu0
  %v218 = vld [vmem:[#allocation2 + $0x2] sm:$0xff]
  %v219 = vld [vmem:[#allocation2 + $0x12] sm:$0xff]
  %s220 = scalar_lea.vmem %s1, 256
  %v221 = vld [vmem:[%s220] sm:$0xff]
  %v222 = vld [vmem:[%s220 + $0x8] sm:$0xff]
  %v223 = vld [vmem:[%s220 + $0x10] sm:$0xff]
  %v224 = vld [vmem:[%s220 + $0x18] sm:$0xff]
  %v225 = vld [vmem:[%s220 + $0x20] sm:$0xff]
  %v226 = vld [vmem:[%s220 + $0x28] sm:$0xff]
  %v227 = vld [vmem:[%s220 + $0x30] sm:$0xff]
  %v228 = vld [vmem:[%s220 + $0x38] sm:$0xff]
  %v229 = vld [vmem:[%s220 + $0x40] sm:$0xff]
  %v230 = vld [vmem:[%s220 + $0x48] sm:$0xff]
  %v231 = vld [vmem:[%s220 + $0x50] sm:$0xff]
  %v232 = vld [vmem:[%s220 + $0x58] sm:$0xff]
  %v233 = vld [vmem:[%s220 + $0x60] sm:$0xff]
  %v234 = vld [vmem:[%s220 + $0x68] sm:$0xff]
  %v235 = vld [vmem:[%s220 + $0x70] sm:$0xff]
  %v236 = vld [vmem:[%s220 + $0x78] sm:$0xff]
  %237 = vmatprep.subr.mxu0 0.0
  %238 = vmatpush1.msra.mxu0 %v221
  %239 = vmatprep.subr.mxu0 0.0
  %240 = vmatpush1.msra.mxu0 %v222
  %241 = vmatprep.subr.mxu0 0.0
  %242 = vmatpush1.msra.mxu0 %v223
  %243 = vmatprep.subr.mxu0 0.0
  %244 = vmatpush1.msra.mxu0 %v224
  %245 = vmatprep.subr.mxu0 0.0
  %246 = vmatpush1.msra.mxu0 %v225
  %247 = vmatprep.subr.mxu0 0.0
  %248 = vmatpush1.msra.mxu0 %v226
  %249 = vmatprep.subr.mxu0 0.0
  %250 = vmatpush1.msra.mxu0 %v227
  %251 = vmatprep.subr.mxu0 0.0
  %252 = vmatpush1.msra.mxu0 %v228
  %253 = vmatprep.subr.mxu0 0.0
  %254 = vmatpush1.msra.mxu0 %v229
  %255 = vmatprep.subr.mxu0 0.0
  %256 = vmatpush1.msra.mxu0 %v230
  %257 = vmatprep.subr.mxu0 0.0
  %258 = vmatpush1.msra.mxu0 %v231
  %259 = vmatprep.subr.mxu0 0.0
  %260 = vmatpush1.msra.mxu0 %v232
  %261 = vmatprep.subr.mxu0 0.0
  %262 = vmatpush1.msra.mxu0 %v233
  %263 = vmatprep.subr.mxu0 0.0
  %264 = vmatpush1.msra.mxu0 %v234
  %265 = vmatprep.subr.mxu0 0.0
  %266 = vmatpush1.msra.mxu0 %v235
  %267 = vmatprep.subr.mxu0 0.0
  %268 = vmatpush1.msra.mxu0 %v236
  %269 = vmatprep.subr.mxu0 0.0
  %270 = vmatpush1.msra.mxu0 0.0
  %271 = vmatprep.subr.mxu0 0.0
  %272 = vmatpush1.msra.mxu0 0.0
  %273 = vmatprep.subr.mxu0 0.0
  %274 = vmatpush1.msra.mxu0 0.0
  %275 = vmatprep.subr.mxu0 0.0
  %276 = vmatpush1.msra.mxu0 0.0
  %277 = vmatprep.subr.mxu0 0.0
  %278 = vmatpush1.msra.mxu0 0.0
  %279 = vmatprep.subr.mxu0 0.0
  %280 = vmatpush1.msra.mxu0 0.0
  %281 = vmatprep.subr.mxu0 0.0
  %282 = vmatpush1.msra.mxu0 0.0
  %283 = vmatprep.subr.mxu0 0.0
  %284 = vmatpush1.msra.mxu0 0.0
  %285 = vmatprep.subr.mxu0 0.0
  %286 = vmatpush1.msra.mxu0 0.0
  %287 = vmatprep.subr.mxu0 0.0
  %288 = vmatpush1.msra.mxu0 0.0
  %289 = vmatprep.subr.mxu0 0.0
  %290 = vmatpush1.msra.mxu0 0.0
  %291 = vmatprep.subr.mxu0 0.0
  %292 = vmatpush1.msra.mxu0 0.0
  %293 = vmatprep.subr.mxu0 0.0
  %294 = vmatpush1.msra.mxu0 0.0
  %295 = vmatprep.subr.mxu0 0.0
  %296 = vmatpush1.msra.mxu0 0.0
  %297 = vmatprep.subr.mxu0 0.0
  %298 = vmatpush1.msra.mxu0 0.0
  %299 = vmatprep.subr.mxu0 0.0
  %300 = vmatpush1.msra.mxu0 0.0
  %301 = vmatprep.mubr.f32.mxu0 0.0
  %302 = vmatmul.mubr.f32.gmra.mrb[0].mxu0 %v218
  %v303 = vpop.f32.mrb[0].mxu0
  %v304 = vadd.f32 0.0, %v303
  %v305 = vpop.f32.mrb[0].mxu0
  %306 = vmatprep.mubr.f32.mxu0 0.0
  %307 = vmatmul.mubr.f32.gmra.mrb[0].mxu0 %v219
  %v308 = vpop.f32.mrb[0].mxu0
  %v309 = vadd.f32 0.0, %v308
  %v310 = vpop.f32.mrb[0].mxu0
  %311 = vdwg.mxu0
  %v312 = vadd.f32 %v210, %v304
  %v313 = vadd.f32 %v215, %v309
  %v314 = vlaneseq
  %v315 = vshrl.u32 %v314, 7
  %v316 = vadd.s32 %v315, 8
  %v317 = vadd.s32 %v315, 16
  %v318 = vadd.s32 %v315, 24
  %v319 = vadd.s32 %v315, 32
  %v320 = vadd.s32 %v315, 40
  %v321 = vadd.s32 %v315, 48
  %v322 = vadd.s32 %v315, 56
  %v323 = vadd.s32 %v315, 64
  %v324 = vadd.s32 %v315, 72
  %v325 = vadd.s32 %v315, 80
  %v326 = vadd.s32 %v315, 88
  %v327 = vadd.s32 %v315, 96
  %v328 = vadd.s32 %v315, 104
  %v329 = vadd.s32 %v315, 112
  %v330 = vadd.s32 %v315, 120
  %vm331 = vcmp.lt.s32.totalorder %v315, 0
  %v332 = vsub.s32 0, %v315
  %v333 = vsel %vm331, %v332, %v315
  %v334 = vshrl.u32 %v333, 2
  %v335 = vand.u32 %v333, 3
  %v336 = vsub.s32 0, %v335
  %v337 = vsel %vm331, %v336, %v335
  %vm338 = vcmp.lt.s32.totalorder %v316, 0
  %v339 = vsub.s32 0, %v316
  %v340 = vsel %vm338, %v339, %v316
  %v341 = vshrl.u32 %v340, 2
  %v342 = vand.u32 %v340, 3
  %v343 = vsub.s32 0, %v342
  %v344 = vsel %vm338, %v343, %v342
  %vm345 = vcmp.lt.s32.totalorder %v317, 0
  %v346 = vsub.s32 0, %v317
  %v347 = vsel %vm345, %v346, %v317
  %v348 = vshrl.u32 %v347, 2
  %v349 = vand.u32 %v347, 3
  %v350 = vsub.s32 0, %v349
  %v351 = vsel %vm345, %v350, %v349
  %vm352 = vcmp.lt.s32.totalorder %v318, 0
  %v353 = vsub.s32 0, %v318
  %v354 = vsel %vm352, %v353, %v318
  %v355 = vshrl.u32 %v354, 2
  %v356 = vand.u32 %v354, 3
  %v357 = vsub.s32 0, %v356
  %v358 = vsel %vm352, %v357, %v356
  %vm359 = vcmp.lt.s32.totalorder %v319, 0
  %v360 = vsub.s32 0, %v319
  %v361 = vsel %vm359, %v360, %v319
  %v362 = vshrl.u32 %v361, 2
  %v363 = vand.u32 %v361, 3
  %v364 = vsub.s32 0, %v363
  %v365 = vsel %vm359, %v364, %v363
  %vm366 = vcmp.lt.s32.totalorder %v320, 0
  %v367 = vsub.s32 0, %v320
  %v368 = vsel %vm366, %v367, %v320
  %v369 = vshrl.u32 %v368, 2
  %v370 = vand.u32 %v368, 3
  %v371 = vsub.s32 0, %v370
  %v372 = vsel %vm366, %v371, %v370
  %vm373 = vcmp.lt.s32.totalorder %v321, 0
  %v374 = vsub.s32 0, %v321
  %v375 = vsel %vm373, %v374, %v321
  %v376 = vshrl.u32 %v375, 2
  %v377 = vand.u32 %v375, 3
  %v378 = vsub.s32 0, %v377
  %v379 = vsel %vm373, %v378, %v377
  %vm380 = vcmp.lt.s32.totalorder %v322, 0
  %v381 = vsub.s32 0, %v322
  %v382 = vsel %vm380, %v381, %v322
  %v383 = vshrl.u32 %v382, 2
  %v384 = vand.u32 %v382, 3
  %v385 = vsub.s32 0, %v384
  %v386 = vsel %vm380, %v385, %v384
  %vm387 = vcmp.lt.s32.totalorder %v323, 0
  %v388 = vsub.s32 0, %v323
  %v389 = vsel %vm387, %v388, %v323
  %v390 = vshrl.u32 %v389, 2
  %v391 = vand.u32 %v389, 3
  %v392 = vsub.s32 0, %v391
  %v393 = vsel %vm387, %v392, %v391
  %vm394 = vcmp.lt.s32.totalorder %v324, 0
  %v395 = vsub.s32 0, %v324
  %v396 = vsel %vm394, %v395, %v324
  %v397 = vshrl.u32 %v396, 2
  %v398 = vand.u32 %v396, 3
  %v399 = vsub.s32 0, %v398
  %v400 = vsel %vm394, %v399, %v398
  %vm401 = vcmp.lt.s32.totalorder %v325, 0
  %v402 = vsub.s32 0, %v325
  %v403 = vsel %vm401, %v402, %v325
  %v404 = vshrl.u32 %v403, 2
  %v405 = vand.u32 %v403, 3
  %v406 = vsub.s32 0, %v405
  %v407 = vsel %vm401, %v406, %v405
  %vm408 = vcmp.lt.s32.totalorder %v326, 0
  %v409 = vsub.s32 0, %v326
  %v410 = vsel %vm408, %v409, %v326
  %v411 = vshrl.u32 %v410, 2
  %v412 = vand.u32 %v410, 3
  %v413 = vsub.s32 0, %v412
  %v414 = vsel %vm408, %v413, %v412
  %vm415 = vcmp.lt.s32.totalorder %v327, 0
  %v416 = vsub.s32 0, %v327
  %v417 = vsel %vm415, %v416, %v327
  %v418 = vshrl.u32 %v417, 2
  %v419 = vand.u32 %v417, 3
  %v420 = vsub.s32 0, %v419
  %v421 = vsel %vm415, %v420, %v419
  %vm422 = vcmp.lt.s32.totalorder %v328, 0
  %v423 = vsub.s32 0, %v328
  %v424 = vsel %vm422, %v423, %v328
  %v425 = vshrl.u32 %v424, 2
  %v426 = vand.u32 %v424, 3
  %v427 = vsub.s32 0, %v426
  %v428 = vsel %vm422, %v427, %v426
  %vm429 = vcmp.lt.s32.totalorder %v329, 0
  %v430 = vsub.s32 0, %v329
  %v431 = vsel %vm429, %v430, %v329
  %v432 = vshrl.u32 %v431, 2
  %v433 = vand.u32 %v431, 3
  %v434 = vsub.s32 0, %v433
  %v435 = vsel %vm429, %v434, %v433
  %vm436 = vcmp.lt.s32.totalorder %v330, 0
  %v437 = vsub.s32 0, %v330
  %v438 = vsel %vm436, %v437, %v330
  %v439 = vshrl.u32 %v438, 2
  %v440 = vand.u32 %v438, 3
  %v441 = vsub.s32 0, %v440
  %v442 = vsel %vm436, %v441, %v440
  %vm443 = vcmp.ne.s32.totalorder %v337, 0
  %vm444 = vcmp.ne.s32.totalorder %v344, 0
  %vm445 = vcmp.ne.s32.totalorder %v351, 0
  %vm446 = vcmp.ne.s32.totalorder %v358, 0
  %vm447 = vcmp.ne.s32.totalorder %v365, 0
  %vm448 = vcmp.ne.s32.totalorder %v372, 0
  %vm449 = vcmp.ne.s32.totalorder %v379, 0
  %vm450 = vcmp.ne.s32.totalorder %v386, 0
  %vm451 = vcmp.ne.s32.totalorder %v393, 0
  %vm452 = vcmp.ne.s32.totalorder %v400, 0
  %vm453 = vcmp.ne.s32.totalorder %v407, 0
  %vm454 = vcmp.ne.s32.totalorder %v414, 0
  %vm455 = vcmp.ne.s32.totalorder %v421, 0
  %vm456 = vcmp.ne.s32.totalorder %v428, 0
  %vm457 = vcmp.ne.s32.totalorder %v435, 0
  %vm458 = vcmp.ne.s32.totalorder %v442, 0
  %vm459 = vcmp.lt.s32.totalorder %v337, 0
  %vm460 = vcmp.lt.s32.totalorder %v344, 0
  %vm461 = vcmp.lt.s32.totalorder %v351, 0
  %vm462 = vcmp.lt.s32.totalorder %v358, 0
  %vm463 = vcmp.lt.s32.totalorder %v365, 0
  %vm464 = vcmp.lt.s32.totalorder %v372, 0
  %vm465 = vcmp.lt.s32.totalorder %v379, 0
  %vm466 = vcmp.lt.s32.totalorder %v386, 0
  %vm467 = vcmp.lt.s32.totalorder %v393, 0
  %vm468 = vcmp.lt.s32.totalorder %v400, 0
  %vm469 = vcmp.lt.s32.totalorder %v407, 0
  %vm470 = vcmp.lt.s32.totalorder %v414, 0
  %vm471 = vcmp.lt.s32.totalorder %v421, 0
  %vm472 = vcmp.lt.s32.totalorder %v428, 0
  %vm473 = vcmp.lt.s32.totalorder %v435, 0
  %vm474 = vcmp.lt.s32.totalorder %v442, 0
  %vm475 = vmand %vm459, %vm443
  %vm476 = vmand %vm460, %vm444
  %vm477 = vmand %vm461, %vm445
  %vm478 = vmand %vm462, %vm446
  %vm479 = vmand %vm463, %vm447
  %vm480 = vmand %vm464, %vm448
  %vm481 = vmand %vm465, %vm449
  %vm482 = vmand %vm466, %vm450
  %vm483 = vmand %vm467, %vm451
  %vm484 = vmand %vm468, %vm452
  %vm485 = vmand %vm469, %vm453
  %vm486 = vmand %vm470, %vm454
  %vm487 = vmand %vm471, %vm455
  %vm488 = vmand %vm472, %vm456
  %vm489 = vmand %vm473, %vm457
  %vm490 = vmand %vm474, %vm458
  %v491 = vadd.s32 %v337, 4
  %v492 = vadd.s32 %v344, 4
  %v493 = vadd.s32 %v351, 4
  %v494 = vadd.s32 %v358, 4
  %v495 = vadd.s32 %v365, 4
  %v496 = vadd.s32 %v372, 4
  %v497 = vadd.s32 %v379, 4
  %v498 = vadd.s32 %v386, 4
  %v499 = vadd.s32 %v393, 4
  %v500 = vadd.s32 %v400, 4
  %v501 = vadd.s32 %v407, 4
  %v502 = vadd.s32 %v414, 4
  %v503 = vadd.s32 %v421, 4
  %v504 = vadd.s32 %v428, 4
  %v505 = vadd.s32 %v435, 4
  %v506 = vadd.s32 %v442, 4
  %v507 = vsel %vm475, %v491, %v337
  %v508 = vsel %vm476, %v492, %v344
  %v509 = vsel %vm477, %v493, %v351
  %v510 = vsel %vm478, %v494, %v358
  %v511 = vsel %vm479, %v495, %v365
  %v512 = vsel %vm480, %v496, %v372
  %v513 = vsel %vm481, %v497, %v379
  %v514 = vsel %vm482, %v498, %v386
  %v515 = vsel %vm483, %v499, %v393
  %v516 = vsel %vm484, %v500, %v400
  %v517 = vsel %vm485, %v501, %v407
  %v518 = vsel %vm486, %v502, %v414
  %v519 = vsel %vm487, %v503, %v421
  %v520 = vsel %vm488, %v504, %v428
  %v521 = vsel %vm489, %v505, %v435
  %v522 = vsel %vm490, %v506, %v442
  %v523 = vlaneseq
  %v524 = vand.u32 %v523, 127
  %vm525 = vcmp.lt.s32.totalorder %v524, 0
  %v526 = vsub.s32 0, %v524
  %v527 = vsel %vm525, %v526, %v524
  %v528 = vshrl.u32 %v527, 2
  %v529 = vand.u32 %v527, 3
  %v530 = vsub.s32 0, %v529
  %v531 = vsel %vm525, %v530, %v529
  %vm532 = vcmp.ne.s32.totalorder %v531, 0
  %vm533 = vcmp.lt.s32.totalorder %v531, 0
  %vm534 = vmand %vm533, %vm532
  %v535 = vadd.s32 %v531, 4
  %v536 = vsel %vm534, %v535, %v531
  %vm537 = vcmp.eq.s32.totalorder %v507, %v536
  %vm538 = vcmp.eq.s32.totalorder %v508, %v536
  %vm539 = vcmp.eq.s32.totalorder %v509, %v536
  %vm540 = vcmp.eq.s32.totalorder %v510, %v536
  %vm541 = vcmp.eq.s32.totalorder %v511, %v536
  %vm542 = vcmp.eq.s32.totalorder %v512, %v536
  %vm543 = vcmp.eq.s32.totalorder %v513, %v536
  %vm544 = vcmp.eq.s32.totalorder %v514, %v536
  %vm545 = vcmp.eq.s32.totalorder %v515, %v536
  %vm546 = vcmp.eq.s32.totalorder %v516, %v536
  %vm547 = vcmp.eq.s32.totalorder %v517, %v536
  %vm548 = vcmp.eq.s32.totalorder %v518, %v536
  %vm549 = vcmp.eq.s32.totalorder %v519, %v536
  %vm550 = vcmp.eq.s32.totalorder %v520, %v536
  %vm551 = vcmp.eq.s32.totalorder %v521, %v536
  %vm552 = vcmp.eq.s32.totalorder %v522, %v536
  %v553 = vsel %vm537, 1, 0
  %v554 = vsel %vm538, 1, 0
  %v555 = vsel %vm539, 1, 0
  %v556 = vsel %vm540, 1, 0
  %v557 = vsel %vm541, 1, 0
  %v558 = vsel %vm542, 1, 0
  %v559 = vsel %vm543, 1, 0
  %v560 = vsel %vm544, 1, 0
  %v561 = vsel %vm545, 1, 0
  %v562 = vsel %vm546, 1, 0
  %v563 = vsel %vm547, 1, 0
  %v564 = vsel %vm548, 1, 0
  %v565 = vsel %vm549, 1, 0
  %v566 = vsel %vm550, 1, 0
  %v567 = vsel %vm551, 1, 0
  %v568 = vsel %vm552, 1, 0
  %v569 = vcvt.s32.f32 %v553
  %v570 = vcvt.s32.f32 %v554
  %v571 = vcvt.s32.f32 %v555
  %v572 = vcvt.s32.f32 %v556
  %v573 = vcvt.s32.f32 %v557
  %v574 = vcvt.s32.f32 %v558
  %v575 = vcvt.s32.f32 %v559
  %v576 = vcvt.s32.f32 %v560
  %v577 = vcvt.s32.f32 %v561
  %v578 = vcvt.s32.f32 %v562
  %v579 = vcvt.s32.f32 %v563
  %v580 = vcvt.s32.f32 %v564
  %v581 = vcvt.s32.f32 %v565
  %v582 = vcvt.s32.f32 %v566
  %v583 = vcvt.s32.f32 %v567
  %v584 = vcvt.s32.f32 %v568
  %v585 = vadd.f32 %v312, %v313
  %v586 = vrot.slane %v585, 4
  %v587 = vadd.f32 %v585, %v586
  %v588 = vrot.slane %v587, 2
  %v589 = vadd.f32 %v587, %v588
  %v590 = vrot.slane %v589, 1
  %v591 = vadd.f32 %v589, %v590
  %592 = vmatprep.subr.mxu0 0.0
  %593 = vmatpush1.msra.mxu0 %v569
  %594 = vmatprep.subr.mxu0 0.0
  %595 = vmatpush1.msra.mxu0 %v570
  %596 = vmatprep.subr.mxu0 0.0
  %597 = vmatpush1.msra.mxu0 %v571
  %598 = vmatprep.subr.mxu0 0.0
  %599 = vmatpush1.msra.mxu0 %v572
  %600 = vmatprep.subr.mxu0 0.0
  %601 = vmatpush1.msra.mxu0 %v573
  %602 = vmatprep.subr.mxu0 0.0
  %603 = vmatpush1.msra.mxu0 %v574
  %604 = vmatprep.subr.mxu0 0.0
  %605 = vmatpush1.msra.mxu0 %v575
  %606 = vmatprep.subr.mxu0 0.0
  %607 = vmatpush1.msra.mxu0 %v576
  %608 = vmatprep.subr.mxu0 0.0
  %609 = vmatpush1.msra.mxu0 %v577
  %610 = vmatprep.subr.mxu0 0.0
  %611 = vmatpush1.msra.mxu0 %v578
  %612 = vmatprep.subr.mxu0 0.0
  %613 = vmatpush1.msra.mxu0 %v579
  %614 = vmatprep.subr.mxu0 0.0
  %615 = vmatpush1.msra.mxu0 %v580
  %616 = vmatprep.subr.mxu0 0.0
  %617 = vmatpush1.msra.mxu0 %v581
  %618 = vmatprep.subr.mxu0 0.0
  %619 = vmatpush1.msra.mxu0 %v582
  %620 = vmatprep.subr.mxu0 0.0
  %621 = vmatpush1.msra.mxu0 %v583
  %622 = vmatprep.subr.mxu0 0.0
  %623 = vmatpush1.msra.mxu0 %v584
  %624 = vmatprep.subr.mxu0 0.0
  %625 = vmatpush1.msra.mxu0 0.0
  %626 = vmatprep.subr.mxu0 0.0
  %627 = vmatpush1.msra.mxu0 0.0
  %628 = vmatprep.subr.mxu0 0.0
  %629 = vmatpush1.msra.mxu0 0.0
  %630 = vmatprep.subr.mxu0 0.0
  %631 = vmatpush1.msra.mxu0 0.0
  %632 = vmatprep.subr.mxu0 0.0
  %633 = vmatpush1.msra.mxu0 0.0
  %634 = vmatprep.subr.mxu0 0.0
  %635 = vmatpush1.msra.mxu0 0.0
  %636 = vmatprep.subr.mxu0 0.0
  %637 = vmatpush1.msra.mxu0 0.0
  %638 = vmatprep.subr.mxu0 0.0
  %639 = vmatpush1.msra.mxu0 0.0
  %640 = vmatprep.subr.mxu0 0.0
  %641 = vmatpush1.msra.mxu0 0.0
  %642 = vmatprep.subr.mxu0 0.0
  %643 = vmatpush1.msra.mxu0 0.0
  %644 = vmatprep.subr.mxu0 0.0
  %645 = vmatpush1.msra.mxu0 0.0
  %646 = vmatprep.subr.mxu0 0.0
  %647 = vmatpush1.msra.mxu0 0.0
  %648 = vmatprep.subr.mxu0 0.0
  %649 = vmatpush1.msra.mxu0 0.0
  %650 = vmatprep.subr.mxu0 0.0
  %651 = vmatpush1.msra.mxu0 0.0
  %652 = vmatprep.subr.mxu0 0.0
  %653 = vmatpush1.msra.mxu0 0.0
  %654 = vmatprep.subr.mxu0 0.0
  %655 = vmatpush1.msra.mxu0 0.0
  %656 = vmatprep.mubr.f32.mxu0 0.0
  %657 = vmatmul.mubr.f32.gmra.mrb[0].mxu0 %v591
  %v658 = vpop.f32.mrb[0].mxu0
  %v659 = vadd.f32 0.0, %v658
  %v660 = vpop.f32.mrb[0].mxu0
  %661 = vdwg.mxu0
  %v662 = vmul.f32 %v659, 0.001953125
  %v663 = vlaneseq
  %v664 = vshrl.u32 %v663, 7
  %v665 = vsub.s32 0, %v664
  %v666 = vrot.slane %v662, %v665
  %v667 = vsub.f32 %v312, %v666
  %v668 = vsub.f32 %v313, %v666
  %v669 = vmul.f32 %v667, %v667
  %v670 = vmul.f32 %v668, %v668
  %v671 = vadd.f32 %v669, %v670
  %v672 = vrot.slane %v671, 4
  %v673 = vadd.f32 %v671, %v672
  %v674 = vrot.slane %v673, 2
  %v675 = vadd.f32 %v673, %v674
  %v676 = vrot.slane %v675, 1
  %v677 = vadd.f32 %v675, %v676
  %678 = vmatprep.subr.mxu0 0.0
  %679 = vmatpush1.msra.mxu0 %v569
  %680 = vmatprep.subr.mxu0 0.0
  %681 = vmatpush1.msra.mxu0 %v570
  %682 = vmatprep.subr.mxu0 0.0
  %683 = vmatpush1.msra.mxu0 %v571
  %684 = vmatprep.subr.mxu0 0.0
  %685 = vmatpush1.msra.mxu0 %v572
  %686 = vmatprep.subr.mxu0 0.0
  %687 = vmatpush1.msra.mxu0 %v573
  %688 = vmatprep.subr.mxu0 0.0
  %689 = vmatpush1.msra.mxu0 %v574
  %690 = vmatprep.subr.mxu0 0.0
  %691 = vmatpush1.msra.mxu0 %v575
  %692 = vmatprep.subr.mxu0 0.0
  %693 = vmatpush1.msra.mxu0 %v576
  %694 = vmatprep.subr.mxu0 0.0
  %695 = vmatpush1.msra.mxu0 %v577
  %696 = vmatprep.subr.mxu0 0.0
  %697 = vmatpush1.msra.mxu0 %v578
  %698 = vmatprep.subr.mxu0 0.0
  %699 = vmatpush1.msra.mxu0 %v579
  %700 = vmatprep.subr.mxu0 0.0
  %701 = vmatpush1.msra.mxu0 %v580
  %702 = vmatprep.subr.mxu0 0.0
  %703 = vmatpush1.msra.mxu0 %v581
  %704 = vmatprep.subr.mxu0 0.0
  %705 = vmatpush1.msra.mxu0 %v582
  %706 = vmatprep.subr.mxu0 0.0
  %707 = vmatpush1.msra.mxu0 %v583
  %708 = vmatprep.subr.mxu0 0.0
  %709 = vmatpush1.msra.mxu0 %v584
  %710 = vmatprep.subr.mxu0 0.0
  %711 = vmatpush1.msra.mxu0 0.0
  %712 = vmatprep.subr.mxu0 0.0
  %713 = vmatpush1.msra.mxu0 0.0
  %714 = vmatprep.subr.mxu0 0.0
  %715 = vmatpush1.msra.mxu0 0.0
  %716 = vmatprep.subr.mxu0 0.0
  %717 = vmatpush1.msra.mxu0 0.0
  %718 = vmatprep.subr.mxu0 0.0
  %719 = vmatpush1.msra.mxu0 0.0
  %720 = vmatprep.subr.mxu0 0.0
  %721 = vmatpush1.msra.mxu0 0.0
  %722 = vmatprep.subr.mxu0 0.0
  %723 = vmatpush1.msra.mxu0 0.0
  %724 = vmatprep.subr.mxu0 0.0
  %725 = vmatpush1.msra.mxu0 0.0
  %726 = vmatprep.subr.mxu0 0.0
  %727 = vmatpush1.msra.mxu0 0.0
  %728 = vmatprep.subr.mxu0 0.0
  %729 = vmatpush1.msra.mxu0 0.0
  %730 = vmatprep.subr.mxu0 0.0
  %731 = vmatpush1.msra.mxu0 0.0
  %732 = vmatprep.subr.mxu0 0.0
  %733 = vmatpush1.msra.mxu0 0.0
  %734 = vmatprep.subr.mxu0 0.0
  %735 = vmatpush1.msra.mxu0 0.0
  %736 = vmatprep.subr.mxu0 0.0
  %737 = vmatpush1.msra.mxu0 0.0
  %738 = vmatprep.subr.mxu0 0.0
  %739 = vmatpush1.msra.mxu0 0.0
  %740 = vmatprep.subr.mxu0 0.0
  %741 = vmatpush1.msra.mxu0 0.0
  %742 = vmatprep.mubr.f32.mxu0 0.0
  %743 = vmatmul.mubr.f32.gmra.mrb[0].mxu0 %v677
  %v744 = vpop.f32.mrb[0].mxu0
  %v745 = vadd.f32 0.0, %v744
  %v746 = vpop.f32.mrb[0].mxu0
  %747 = vdwg.mxu0
  %v748 = vmul.f32 %v745, 0.001953125
  %v749 = vld [vmem:[%s4] sm:$0x1]
  %v750 = vadd.f32 %v748, 1e-05
  %v751 = vrsqrt.pop %v750
  %v752 = vmul.f32 %v749, %v751
  %v753 = vld [vmem:[%s5] sm:$0x1]
  %v754 = vmul.f32 %v662, %v752
  %v755 = vsub.f32 %v753, %v754
  %v757 = vlaneseq
  %v758 = vshrl.u32 %v757, 7
  %v759 = vsub.s32 0, %v758
  %v760 = vrot.slane %v752, %v759
  %v762 = vmul.f32 %v312, %v760
  %v763 = vmul.f32 %v313, %v760
  %v765 = vlaneseq
  %v766 = vshrl.u32 %v765, 7
  %v767 = vsub.s32 0, %v766
  %v768 = vrot.slane %v755, %v767
  %v770 = vadd.f32 %v762, %v768
  %v771 = vadd.f32 %v763, %v768
  %vm772 = vcmp.gt.f32.partialorder %v770, 0.0
  %vm773 = vcmp.gt.f32.partialorder %v771, 0.0
  %v774 = vmul.f32 %v770, 0.01
  %v775 = vmul.f32 %v771, 0.01
  %v776 = vsel %vm772, %v770, %v774
  %v777 = vsel %vm773, %v771, %v775
  %778 = vst [vmem:[#allocation2 + $0x1] sm:$0xff] %v776
  %779 = vst [vmem:[#allocation2 + $0x11] sm:$0xff] %v777
  %v780 = vld [vmem:[#allocation2] sm:$0xff]
  %v781 = vld [vmem:[#allocation2 + $0x10] sm:$0xff]
  %v782 = vld [vmem:[%s2] sm:$0xff]
  %v783 = vld [vmem:[%s2 + $0x8] sm:$0xff]
  %v784 = vld [vmem:[%s2 + $0x10] sm:$0xff]
  %v785 = vld [vmem:[%s2 + $0x18] sm:$0xff]
  %v786 = vld [vmem:[%s2 + $0x20] sm:$0xff]
  %v787 = vld [vmem:[%s2 + $0x28] sm:$0xff]
  %v788 = vld [vmem:[%s2 + $0x30] sm:$0xff]
  %v789 = vld [vmem:[%s2 + $0x38] sm:$0xff]
  %v790 = vld [vmem:[%s2 + $0x40] sm:$0xff]
  %v791 = vld [vmem:[%s2 + $0x48] sm:$0xff]
  %v792 = vld [vmem:[%s2 + $0x50] sm:$0xff]
  %v793 = vld [vmem:[%s2 + $0x58] sm:$0xff]
  %v794 = vld [vmem:[%s2 + $0x60] sm:$0xff]
  %v795 = vld [vmem:[%s2 + $0x68] sm:$0xff]
  %v796 = vld [vmem:[%s2 + $0x70] sm:$0xff]
  %v797 = vld [vmem:[%s2 + $0x78] sm:$0xff]
  %v798 = vld [vmem:[#allocation2 + $0x1] sm:$0xff]
  %v799 = vld [vmem:[#allocation2 + $0x11] sm:$0xff]
  %s800 = scalar_lea.vmem %s2, 128
  %v801 = vld [vmem:[%s800] sm:$0xff]
  %v802 = vld [vmem:[%s800 + $0x8] sm:$0xff]
  %v803 = vld [vmem:[%s800 + $0x10] sm:$0xff]
  %v804 = vld [vmem:[%s800 + $0x18] sm:$0xff]
  %v805 = vld [vmem:[%s800 + $0x20] sm:$0xff]
  %v806 = vld [vmem:[%s800 + $0x28] sm:$0xff]
  %v807 = vld [vmem:[%s800 + $0x30] sm:$0xff]
  %v808 = vld [vmem:[%s800 + $0x38] sm:$0xff]
  %v809 = vld [vmem:[%s800 + $0x40] sm:$0xff]
  %v810 = vld [vmem:[%s800 + $0x48] sm:$0xff]
  %v811 = vld [vmem:[%s800 + $0x50] sm:$0xff]
  %v812 = vld [vmem:[%s800 + $0x58] sm:$0xff]
  %v813 = vld [vmem:[%s800 + $0x60] sm:$0xff]
  %v814 = vld [vmem:[%s800 + $0x68] sm:$0xff]
  %v815 = vld [vmem:[%s800 + $0x70] sm:$0xff]
  %v816 = vld [vmem:[%s800 + $0x78] sm:$0xff]
  %817 = vmatprep.subr.mxu0 0.0
  %818 = vmatpush1.msra.mxu0 %v801
  %819 = vmatprep.subr.mxu0 0.0
  %820 = vmatpush1.msra.mxu0 %v802
  %821 = vmatprep.subr.mxu0 0.0
  %822 = vmatpush1.msra.mxu0 %v803
  %823 = vmatprep.subr.mxu0 0.0
  %824 = vmatpush1.msra.mxu0 %v804
  %825 = vmatprep.subr.mxu0 0.0
  %826 = vmatpush1.msra.mxu0 %v805
  %827 = vmatprep.subr.mxu0 0.0
  %828 = vmatpush1.msra.mxu0 %v806
  %829 = vmatprep.subr.mxu0 0.0
  %830 = vmatpush1.msra.mxu0 %v807
  %831 = vmatprep.subr.mxu0 0.0
  %832 = vmatpush1.msra.mxu0 %v808
  %833 = vmatprep.subr.mxu0 0.0
  %834 = vmatpush1.msra.mxu0 %v809
  %835 = vmatprep.subr.mxu0 0.0
  %836 = vmatpush1.msra.mxu0 %v810
  %837 = vmatprep.subr.mxu0 0.0
  %838 = vmatpush1.msra.mxu0 %v811
  %839 = vmatprep.subr.mxu0 0.0
  %840 = vmatpush1.msra.mxu0 %v812
  %841 = vmatprep.subr.mxu0 0.0
  %842 = vmatpush1.msra.mxu0 %v813
  %843 = vmatprep.subr.mxu0 0.0
  %844 = vmatpush1.msra.mxu0 %v814
  %845 = vmatprep.subr.mxu0 0.0
  %846 = vmatpush1.msra.mxu0 %v815
  %847 = vmatprep.subr.mxu0 0.0
  %848 = vmatpush1.msra.mxu0 %v816
  %849 = vmatprep.subr.mxu0 0.0
  %850 = vmatpush1.msra.mxu0 0.0
  %851 = vmatprep.subr.mxu0 0.0
  %852 = vmatpush1.msra.mxu0 0.0
  %853 = vmatprep.subr.mxu0 0.0
  %854 = vmatpush1.msra.mxu0 0.0
  %855 = vmatprep.subr.mxu0 0.0
  %856 = vmatpush1.msra.mxu0 0.0
  %857 = vmatprep.subr.mxu0 0.0
  %858 = vmatpush1.msra.mxu0 0.0
  %859 = vmatprep.subr.mxu0 0.0
  %860 = vmatpush1.msra.mxu0 0.0
  %861 = vmatprep.subr.mxu0 0.0
  %862 = vmatpush1.msra.mxu0 0.0
  %863 = vmatprep.subr.mxu0 0.0
  %864 = vmatpush1.msra.mxu0 0.0
  %865 = vmatprep.subr.mxu0 0.0
  %866 = vmatpush1.msra.mxu0 0.0
  %867 = vmatprep.subr.mxu0 0.0
  %868 = vmatpush1.msra.mxu0 0.0
  %869 = vmatprep.subr.mxu0 0.0
  %870 = vmatpush1.msra.mxu0 0.0
  %871 = vmatprep.subr.mxu0 0.0
  %872 = vmatpush1.msra.mxu0 0.0
  %873 = vmatprep.subr.mxu0 0.0
  %874 = vmatpush1.msra.mxu0 0.0
  %875 = vmatprep.subr.mxu0 0.0
  %876 = vmatpush1.msra.mxu0 0.0
  %877 = vmatprep.subr.mxu0 0.0
  %878 = vmatpush1.msra.mxu0 0.0
  %879 = vmatprep.subr.mxu0 0.0
  %880 = vmatpush1.msra.mxu0 0.0
  %881 = vmatprep.mubr.f32.mxu0 0.0
  %882 = vmatmul.mubr.f32.gmra.mrb[0].mxu0 %v798
  %v883 = vpop.f32.mrb[0].mxu0
  %v884 = vadd.f32 0.0, %v883
  %v885 = vpop.f32.mrb[0].mxu0
  %886 = vmatprep.mubr.f32.mxu0 0.0
  %887 = vmatmul.mubr.f32.gmra.mrb[0].mxu0 %v799
  %v888 = vpop.f32.mrb[0].mxu0
  %v889 = vadd.f32 0.0, %v888
  %v890 = vpop.f32.mrb[0].mxu0
  %891 = vdwg.mxu0
  %892 = vmatprep.subr.mxu0 0.0
  %893 = vmatpush1.msra.mxu0 %v782
  %894 = vmatprep.subr.mxu0 0.0
  %895 = vmatpush1.msra.mxu0 %v783
  %896 = vmatprep.subr.mxu0 0.0
  %897 = vmatpush1.msra.mxu0 %v784
  %898 = vmatprep.subr.mxu0 0.0
  %899 = vmatpush1.msra.mxu0 %v785
  %900 = vmatprep.subr.mxu0 0.0
  %901 = vmatpush1.msra.mxu0 %v786
  %902 = vmatprep.subr.mxu0 0.0
  %903 = vmatpush1.msra.mxu0 %v787
  %904 = vmatprep.subr.mxu0 0.0
  %905 = vmatpush1.msra.mxu0 %v788
  %906 = vmatprep.subr.mxu0 0.0
  %907 = vmatpush1.msra.mxu0 %v789
  %908 = vmatprep.subr.mxu0 0.0
  %909 = vmatpush1.msra.mxu0 %v790
  %910 = vmatprep.subr.mxu0 0.0
  %911 = vmatpush1.msra.mxu0 %v791
  %912 = vmatprep.subr.mxu0 0.0
  %913 = vmatpush1.msra.mxu0 %v792
  %914 = vmatprep.subr.mxu0 0.0
  %915 = vmatpush1.msra.mxu0 %v793
  %916 = vmatprep.subr.mxu0 0.0
  %917 = vmatpush1.msra.mxu0 %v794
  %918 = vmatprep.subr.mxu0 0.0
  %919 = vmatpush1.msra.mxu0 %v795
  %920 = vmatprep.subr.mxu0 0.0
  %921 = vmatpush1.msra.mxu0 %v796
  %922 = vmatprep.subr.mxu0 0.0
  %923 = vmatpush1.msra.mxu0 %v797
  %924 = vmatprep.subr.mxu0 0.0
  %925 = vmatpush1.msra.mxu0 0.0
  %926 = vmatprep.subr.mxu0 0.0
  %927 = vmatpush1.msra.mxu0 0.0
  %928 = vmatprep.subr.mxu0 0.0
  %929 = vmatpush1.msra.mxu0 0.0
  %930 = vmatprep.subr.mxu0 0.0
  %931 = vmatpush1.msra.mxu0 0.0
  %932 = vmatprep.subr.mxu0 0.0
  %933 = vmatpush1.msra.mxu0 0.0
  %934 = vmatprep.subr.mxu0 0.0
  %935 = vmatpush1.msra.mxu0 0.0
  %936 = vmatprep.subr.mxu0 0.0
  %937 = vmatpush1.msra.mxu0 0.0
  %938 = vmatprep.subr.mxu0 0.0
  %939 = vmatpush1.msra.mxu0 0.0
  %940 = vmatprep.subr.mxu0 0.0
  %941 = vmatpush1.msra.mxu0 0.0
  %942 = vmatprep.subr.mxu0 0.0
  %943 = vmatpush1.msra.mxu0 0.0
  %944 = vmatprep.subr.mxu0 0.0
  %945 = vmatpush1.msra.mxu0 0.0
  %946 = vmatprep.subr.mxu0 0.0
  %947 = vmatpush1.msra.mxu0 0.0
  %948 = vmatprep.subr.mxu0 0.0
  %949 = vmatpush1.msra.mxu0 0.0
  %950 = vmatprep.subr.mxu0 0.0
  %951 = vmatpush1.msra.mxu0 0.0
  %952 = vmatprep.subr.mxu0 0.0
  %953 = vmatpush1.msra.mxu0 0.0
  %954 = vmatprep.subr.mxu0 0.0
  %955 = vmatpush1.msra.mxu0 0.0
  %956 = vmatprep.mubr.f32.mxu0 0.0
  %957 = vmatmul.mubr.f32.gmra.mrb[0].mxu0 %v780
  %v958 = vpop.f32.mrb[0].mxu0
  %v959 = vadd.f32 %v884, %v958
  %v960 = vpop.f32.mrb[0].mxu0
  %961 = vmatprep.mubr.f32.mxu0 0.0
  %962 = vmatmul.mubr.f32.gmra.mrb[0].mxu0 %v781
  %v963 = vpop.f32.mrb[0].mxu0
  %v964 = vadd.f32 %v889, %v963
  %v965 = vpop.f32.mrb[0].mxu0
  %966 = vdwg.mxu0
  %v967 = vld [vmem:[#allocation2 + $0x2] sm:$0xff]
  %v968 = vld [vmem:[#allocation2 + $0x12] sm:$0xff]
  %s969 = scalar_lea.vmem %s2, 256
  %v970 = vld [vmem:[%s969] sm:$0xff]
  %v971 = vld [vmem:[%s969 + $0x8] sm:$0xff]
  %v972 = vld [vmem:[%s969 + $0x10] sm:$0xff]
  %v973 = vld [vmem:[%s969 + $0x18] sm:$0xff]
  %v974 = vld [vmem:[%s969 + $0x20] sm:$0xff]
  %v975 = vld [vmem:[%s969 + $0x28] sm:$0xff]
  %v976 = vld [vmem:[%s969 + $0x30] sm:$0xff]
  %v977 = vld [vmem:[%s969 + $0x38] sm:$0xff]
  %v978 = vld [vmem:[%s969 + $0x40] sm:$0xff]
  %v979 = vld [vmem:[%s969 + $0x48] sm:$0xff]
  %v980 = vld [vmem:[%s969 + $0x50] sm:$0xff]
  %v981 = vld [vmem:[%s969 + $0x58] sm:$0xff]
  %v982 = vld [vmem:[%s969 + $0x60] sm:$0xff]
  %v983 = vld [vmem:[%s969 + $0x68] sm:$0xff]
  %v984 = vld [vmem:[%s969 + $0x70] sm:$0xff]
  %v985 = vld [vmem:[%s969 + $0x78] sm:$0xff]
  %986 = vmatprep.subr.mxu0 0.0
  %987 = vmatpush1.msra.mxu0 %v970
  %988 = vmatprep.subr.mxu0 0.0
  %989 = vmatpush1.msra.mxu0 %v971
  %990 = vmatprep.subr.mxu0 0.0
  %991 = vmatpush1.msra.mxu0 %v972
  %992 = vmatprep.subr.mxu0 0.0
  %993 = vmatpush1.msra.mxu0 %v973
  %994 = vmatprep.subr.mxu0 0.0
  %995 = vmatpush1.msra.mxu0 %v974
  %996 = vmatprep.subr.mxu0 0.0
  %997 = vmatpush1.msra.mxu0 %v975
  %998 = vmatprep.subr.mxu0 0.0
  %999 = vmatpush1.msra.mxu0 %v976
  %1000 = vmatprep.subr.mxu0 0.0
  %1001 = vmatpush1.msra.mxu0 %v977
  %1002 = vmatprep.subr.mxu0 0.0
  %1003 = vmatpush1.msra.mxu0 %v978
  %1004 = vmatprep.subr.mxu0 0.0
  %1005 = vmatpush1.msra.mxu0 %v979
  %1006 = vmatprep.subr.mxu0 0.0
  %1007 = vmatpush1.msra.mxu0 %v980
  %1008 = vmatprep.subr.mxu0 0.0
  %1009 = vmatpush1.msra.mxu0 %v981
  %1010 = vmatprep.subr.mxu0 0.0
  %1011 = vmatpush1.msra.mxu0 %v982
  %1012 = vmatprep.subr.mxu0 0.0
  %1013 = vmatpush1.msra.mxu0 %v983
  %1014 = vmatprep.subr.mxu0 0.0
  %1015 = vmatpush1.msra.mxu0 %v984
  %1016 = vmatprep.subr.mxu0 0.0
  %1017 = vmatpush1.msra.mxu0 %v985
  %1018 = vmatprep.subr.mxu0 0.0
  %1019 = vmatpush1.msra.mxu0 0.0
  %1020 = vmatprep.subr.mxu0 0.0
  %1021 = vmatpush1.msra.mxu0 0.0
  %1022 = vmatprep.subr.mxu0 0.0
  %1023 = vmatpush1.msra.mxu0 0.0
  %1024 = vmatprep.subr.mxu0 0.0
  %1025 = vmatpush1.msra.mxu0 0.0
  %1026 = vmatprep.subr.mxu0 0.0
  %1027 = vmatpush1.msra.mxu0 0.0
  %1028 = vmatprep.subr.mxu0 0.0
  %1029 = vmatpush1.msra.mxu0 0.0
  %1030 = vmatprep.subr.mxu0 0.0
  %1031 = vmatpush1.msra.mxu0 0.0
  %1032 = vmatprep.subr.mxu0 0.0
  %1033 = vmatpush1.msra.mxu0 0.0
  %1034 = vmatprep.subr.mxu0 0.0
  %1035 = vmatpush1.msra.mxu0 0.0
  %1036 = vmatprep.subr.mxu0 0.0
  %1037 = vmatpush1.msra.mxu0 0.0
  %1038 = vmatprep.subr.mxu0 0.0
  %1039 = vmatpush1.msra.mxu0 0.0
  %1040 = vmatprep.subr.mxu0 0.0
  %1041 = vmatpush1.msra.mxu0 0.0
  %1042 = vmatprep.subr.mxu0 0.0
  %1043 = vmatpush1.msra.mxu0 0.0
  %1044 = vmatprep.subr.mxu0 0.0
  %1045 = vmatpush1.msra.mxu0 0.0
  %1046 = vmatprep.subr.mxu0 0.0
  %1047 = vmatpush1.msra.mxu0 0.0
  %1048 = vmatprep.subr.mxu0 0.0
  %1049 = vmatpush1.msra.mxu0 0.0
  %1050 = vmatprep.mubr.f32.mxu0 0.0
  %1051 = vmatmul.mubr.f32.gmra.mrb[0].mxu0 %v967
  %v1052 = vpop.f32.mrb[0].mxu0
  %v1053 = vadd.f32 0.0, %v1052
  %v1054 = vpop.f32.mrb[0].mxu0
  %1055 = vmatprep.mubr.f32.mxu0 0.0
  %1056 = vmatmul.mubr.f32.gmra.mrb[0].mxu0 %v968
  %v1057 = vpop.f32.mrb[0].mxu0
  %v1058 = vadd.f32 0.0, %v1057
  %v1059 = vpop.f32.mrb[0].mxu0
  %1060 = vdwg.mxu0
  %v1061 = vadd.f32 %v959, %v1053
  %v1062 = vadd.f32 %v964, %v1058
  %v1063 = vld [vmem:[%s3] sm:$0x1]
  %v1065 = vlaneseq
  %v1066 = vshrl.u32 %v1065, 7
  %v1067 = vsub.s32 0, %v1066
  %v1068 = vrot.slane %v1063, %v1067
  %v1070 = vadd.f32 %v1061, %v1068
  %v1071 = vadd.f32 %v1062, %v1068
  %v1072 = vadd.f32 %v27, %v1070
  %v1073 = vadd.f32 %v28, %v1071
  %vm1074 = vcmp.gt.f32.partialorder %v1072, 0.0
  %vm1075 = vcmp.gt.f32.partialorder %v1073, 0.0
  %v1076 = vmul.f32 %v1072, 0.01
  %v1077 = vmul.f32 %v1073, 0.01
  %v1078 = vsel %vm1074, %v1072, %v1076
  %v1079 = vsel %vm1075, %v1073, %v1077
  %1080 = vst [vmem:[%s6] sm:$0xff] %v1078
  %1081 = vst [vmem:[%s6 + $0x8] sm:$0xff] %v1079
  // Predicated region
  $region26: #{resnet_block_forward.1} parent=0 // pred_check
    _
  $region27: #{resnet_block_forward.1} parent=0 // pred_check_branch
    %1083 = sbr.rel (0) target = $region29
  $region28: #{resnet_block_forward.1} parent=0 // pred_region
    _
  $region29: #{resnet_block_forward.1} parent=0 // pred_fallthru
    _
  // Predicated region
  $region30: #{resnet_block_forward.1} parent=0 // pred_check
    _
  $region31: #{resnet_block_forward.1} parent=0 // pred_check_branch
    %1085 = sbr.rel (0) target = $region33
  $region32: #{resnet_block_forward.1} parent=0 // pred_region
    _
  $region33: #{resnet_block_forward.1} parent=0 // pred_fallthru
    _

</llo_original>
